<compile_context>
chip_gen: v5e
topology: v5e:2x2
jax: 0.10.0
libtpu: 0.0.40
codegen_flags: <defaults>
</compile_context>

<pallas_src>
import functools

import jax
import jax.numpy as jnp
from jax import lax
from jax.experimental import pallas as pl
from jax.experimental.pallas import tpu as pltpu


def _softplus(x):
    # Matches torch.nn.Softplus(beta=1, threshold=20)
    return jnp.where(x > 20.0, x, jnp.log1p(jnp.exp(jnp.minimum(x, 20.0))))


def _decoder_kernel(
    x_ref,       # [T, BT, Din]  bf16  flipped+shifted concat input (batch tile)
    z_ref,       # [BT, L]       f32   latent (batch tile)
    wz_ref,      # [L, H]        f32   expand_z weight (pre-transposed)
    bz_ref,      # [1, H]        f32
    win_ref,     # [Din, 4H]     bf16  fused Wemb @ Wih
    bin_ref,     # [1, 4H]       f32   fused bemb @ Wih + bih + bhh
    whh_ref,     # [H, 4H]       bf16  LSTM weight_hh (pre-transposed)
    whead_ref,   # [H, DP]       bf16  [wa | wb | wber | 0-pad]  (lane-dense)
    bhead_ref,   # [1, DP]       f32   [ba | bb | bber | 0-pad]
    out_ref,     # [T, BT, DP]   f32
    gates_scr,   # scratch [T, BT, 4H] f32   precomputed input gate contribution
    hs_scr,      # scratch [T, BT, H]  bf16  h_t history (matmul-ready)
    *,
    two_c,       # static: number of softplus columns (alpha + beta)
):
    T, BT, Din = x_ref.shape
    H = wz_ref.shape[1]
    DP = out_ref.shape[-1]

    # ---- (1) bulk input projection: one MXU matmul (bf16 in, f32 acc) ------
    x2 = x_ref[...].reshape(T * BT, Din)
    gates_scr[...] = (
        jnp.dot(x2, win_ref[...], preferred_element_type=jnp.float32)
        + bin_ref[...]
    ).reshape(T, BT, 4 * H)

    # ---- (2) initial state: h0 = expand_z(z), c0 = 0 (vreg-resident, f32) --
    h = (
        jnp.dot(z_ref[...], wz_ref[...], preferred_element_type=jnp.float32)
        + bz_ref[...]
    )
    c = jnp.zeros_like(h)

    whh = whh_ref[...]  # hoist recurrent weight load out of the loop (bf16)

    # ---- (3) serial recurrence: only h @ Whh remains inside ----------------
    # T is static -> full Python unroll; h/c never round-trip through VMEM.
    for t in range(T):
        gates = gates_scr[t] + jnp.dot(
            h.astype(whh.dtype), whh, preferred_element_type=jnp.float32
        )
        # Two full-width EUP launches (sigmoid/tanh over the lane-dense 4H
        # gate vector) instead of four narrow ones, then per-gate slices.
        # PyTorch gate order: i, f, g, o.
        # TODO(synk): with H < 128 the per-gate slices are 25%-lane extracts;
        #             with production H >= 128 each gate is a full lane tile.
        sig = jax.nn.sigmoid(gates)
        th = jnp.tanh(gates)
        i_g = sig[:, 0 * H:1 * H]
        f_g = sig[:, 1 * H:2 * H]
        g_g = th[:, 2 * H:3 * H]
        o_g = sig[:, 3 * H:4 * H]
        c = f_g * c + i_g * g_g
        h = o_g * jnp.tanh(c)
        hs_scr[t] = h.astype(hs_scr.dtype)

    # ---- (4) bulk output heads: one matmul + masked softplus, lane-dense ---
    raw = (
        jnp.dot(
            hs_scr[...].reshape(T * BT, H),
            whead_ref[...],
            preferred_element_type=jnp.float32,
        )
        + bhead_ref[...]
    )
    col = lax.broadcasted_iota(jnp.int32, raw.shape, dimension=1)
    # softplus only on the real alpha/beta columns; bernoulli + padding linear
    out_ref[...] = jnp.where(col < two_c, _softplus(raw), raw).reshape(T, BT, DP)


def init_params(key, input_size_c, input_size_b, hidden_size_d, latent_size):
    """Deterministic synthetic parameters (shapes match the PyTorch module)."""
    Din = (input_size_c + input_size_b) * 2
    H = hidden_size_d
    L = latent_size
    ks = jax.random.split(key, 12)
    scale = 0.1

    def w(k, shape):
        return scale * jax.random.normal(k, shape, dtype=jnp.float32)

    return dict(
        # stored already transposed for right-multiplication x @ W
        wz=w(ks[0], (L, H)), bz=w(ks[1], (1, H)),
        wemb=w(ks[2], (Din, H)), bemb=w(ks[3], (1, H)),
        wih=w(ks[4], (H, 4 * H)), bih=w(ks[5], (1, 4 * H)),
        whh=w(ks[6], (H, 4 * H)), bhh=w(ks[7], (1, 4 * H)),
        wa=w(ks[8], (H, input_size_c)), ba=scale * jnp.ones((1, input_size_c), jnp.float32),
        wb=w(ks[9], (H, input_size_c)), bb=scale * jnp.ones((1, input_size_c), jnp.float32),
        wber=w(ks[10], (H, input_size_b)), bber=w(ks[11], (1, input_size_b)),
    )


def prepare_params(params):
    """One-time weight fusion / lane padding / bf16 casts (outside the jitted
    forward so the per-call wrapper does no redundant weight math)."""
    C = params["wa"].shape[1]
    Bn = params["wber"].shape[1]
    Dout = 2 * C + Bn
    DP = ((Dout + 127) // 128) * 128  # lane-dense head output width

    w_in = (params["wemb"] @ params["wih"]).astype(jnp.bfloat16)          # [Din,4H]
    b_in = (params["bemb"] @ params["wih"] + params["bih"]
            + params["bhh"]).astype(jnp.float32)                          # [1,4H]
    w_head = jnp.concatenate([params["wa"], params["wb"], params["wber"]], -1)
    b_head = jnp.concatenate([params["ba"], params["bb"], params["bber"]], -1)
    w_head = jnp.pad(w_head, ((0, 0), (0, DP - Dout))).astype(jnp.bfloat16)  # [H,DP]
    b_head = jnp.pad(b_head, ((0, 0), (0, DP - Dout))).astype(jnp.float32)   # [1,DP]

    return dict(
        wz=params["wz"].astype(jnp.float32),
        bz=params["bz"].astype(jnp.float32),
        w_in=w_in, b_in=b_in,
        whh=params["whh"].astype(jnp.bfloat16),
        w_head=w_head, b_head=b_head,
    )


@jax.jit
def decoder_forward(prepared, x_c, x_b, m_c, m_b, z):
    """Pallas implementation of Decoder.forward.

    x_c, m_c: [B, T, C]    x_b, m_b: [B, T, Bn]    z: [B, L]
    Returns dict of alpha [B,T,C], beta [B,T,C], bernoulli [B,T,Bn].
    """
    B, T, C = x_c.shape
    Bn = x_b.shape[-1]
    H = prepared["whh"].shape[0]
    L = prepared["wz"].shape[0]
    DP = prepared["w_head"].shape[-1]
    Dout = 2 * C + Bn

    # Pad batch up to a full sublane tile (multiple of 8).
    BP = max(8, ((B + 7) // 8) * 8)
    # Batch-tile grid axis (parallel) -> shards across v7x's 2 TensorCores;
    # at most one extra cheap grid step on 1-TC chips.
    n_btiles = 2 if (BP >= 16 and BP % 16 == 0) else 1
    BT = BP // n_btiles

    # ---- glue: flip / concat / shift / pad / time-major (XLA fuses this) ---
    x = jnp.concatenate(
        [jnp.flip(x_c, 1), jnp.flip(x_b, 1), jnp.flip(m_c, 1), jnp.flip(m_b, 1)],
        axis=-1,
    )                                                               # [B, T, Din]
    Din = x.shape[-1]
    x = jnp.concatenate([jnp.zeros((B, 1, Din), x.dtype), x[:, :-1, :]], 1)
    x3 = jnp.transpose(x, (1, 0, 2))                                # [T, B, Din]
    x3 = jnp.pad(x3, ((0, 0), (0, BP - B), (0, 0))).astype(jnp.bfloat16)
    z_p = jnp.pad(z.astype(jnp.float32), ((0, BP - B), (0, 0)))     # [BP, L]

    # Scoped VMEM budget (v5e default is only 16 MiB of 128 MiB physical).
    vmem_need = (
        2 * (T * BT * Din * 2 + BT * L * 4)          # double-buffered inputs
        + 2 * (T * BT * DP * 4)                      # double-buffered output
        + sum(int(prepared[k].size) * prepared[k].dtype.itemsize
              for k in ("wz", "bz", "w_in", "b_in", "whh", "w_head", "b_head"))
        + T * BT * 4 * H * 4 + T * BT * H * 2        # scratch
    )
    vmem_limit = int(min(64 * 2 ** 20, max(16 * 2 ** 20, 2 * vmem_need)))

    out = pl.pallas_call(
        functools.partial(_decoder_kernel, two_c=2 * C),
        out_shape=jax.ShapeDtypeStruct((T, BP, DP), jnp.float32),
        grid_spec=pltpu.PrefetchScalarGridSpec(
            num_scalar_prefetch=0,
            grid=(n_btiles,),
            in_specs=[
                pl.BlockSpec((T, BT, Din), lambda b: (0, b, 0)),       # x
                pl.BlockSpec((BT, L), lambda b: (b, 0)),               # z
                pl.BlockSpec((L, H), lambda b: (0, 0)),                # wz
                pl.BlockSpec((1, H), lambda b: (0, 0)),                # bz
                pl.BlockSpec((Din, 4 * H), lambda b: (0, 0)),          # w_in
                pl.BlockSpec((1, 4 * H), lambda b: (0, 0)),            # b_in
                pl.BlockSpec((H, 4 * H), lambda b: (0, 0)),            # whh
                pl.BlockSpec((H, DP), lambda b: (0, 0)),               # w_head
                pl.BlockSpec((1, DP), lambda b: (0, 0)),               # b_head
            ],
            out_specs=pl.BlockSpec((T, BT, DP), lambda b: (0, b, 0)),
            scratch_shapes=[
                pltpu.VMEM((T, BT, 4 * H), jnp.float32),   # gate input slab
                pltpu.VMEM((T, BT, H), jnp.bfloat16),      # h_t history
            ],
        ),
        compiler_params=pltpu.CompilerParams(
            dimension_semantics=("parallel",),
            vmem_limit_bytes=vmem_limit,
        ),
    )(
        x3, z_p,
        prepared["wz"], prepared["bz"],
        prepared["w_in"], prepared["b_in"],
        prepared["whh"],
        prepared["w_head"], prepared["b_head"],
    )

    # drop batch/lane padding, back to batch_first, flip along time, split heads
    out = out[:, :B, :Dout]                                         # [T, B, Dout]
    out = jnp.flip(jnp.transpose(out, (1, 0, 2)), axis=1)           # [B, T, Dout]
    return {
        "alpha": out[..., :C],
        "beta": out[..., C:2 * C],
        "bernoulli": out[..., 2 * C:],
    }


# ------------------------- pure-JAX f32 reference -------------------------
def decoder_reference(params, x_c, x_b, m_c, m_b, z):
    B, T, C = x_c.shape
    H = params["wz"].shape[-1]
    x = jnp.concatenate(
        [jnp.flip(x_c, 1), jnp.flip(x_b, 1), jnp.flip(m_c, 1), jnp.flip(m_b, 1)], -1
    )
    x = jnp.concatenate([jnp.zeros((B, 1, x.shape[-1]), x.dtype), x[:, :-1, :]], 1)
    emb = x @ params["wemb"] + params["bemb"]                       # [B, T, H]
    h0 = z @ params["wz"] + params["bz"][0]                         # [B, H]
    c0 = jnp.zeros_like(h0)

    def step(carry, e_t):
        h, c = carry
        gates = e_t @ params["wih"] + params["bih"][0] + h @ params["whh"] + params["bhh"][0]
        i = jax.nn.sigmoid(gates[:, 0 * H:1 * H])
        f = jax.nn.sigmoid(gates[:, 1 * H:2 * H])
        g = jnp.tanh(gates[:, 2 * H:3 * H])
        o = jax.nn.sigmoid(gates[:, 3 * H:4 * H])
        c = f * c + i * g
        h = o * jnp.tanh(c)
        return (h, c), h

    _, hs = lax.scan(step, (h0, c0), jnp.transpose(emb, (1, 0, 2)))  # [T, B, H]
    hs = jnp.transpose(hs, (1, 0, 2))                                # [B, T, H]
    alpha = _softplus(hs @ params["wa"] + params["ba"][0])
    beta = _softplus(hs @ params["wb"] + params["bb"][0])
    bern = hs @ params["wber"] + params["bber"][0]
    return {
        "alpha": jnp.flip(alpha, 1),
        "beta": jnp.flip(beta, 1),
        "bernoulli": jnp.flip(bern, 1),
    }


if __name__ == "__main__":
    # Small shapes consistent with the module's forward.
    input_size_c, input_size_b = 4, 4
    hidden_size_d, latent_size = 32, 16
    num_layers = 1  # forward only supports 1 (see note above)
    B, T = 2, 8

    key = jax.random.PRNGKey(0)
    kp, k1, k2, k3, k4, k5 = jax.random.split(key, 6)
    params = init_params(kp, input_size_c, input_size_b, hidden_size_d, latent_size)
    prepared = prepare_params(params)   # one-time weight fusion / padding / casts

    x_c = jax.random.normal(k1, (B, T, input_size_c), jnp.float32)
    x_b = (jax.random.uniform(k2, (B, T, input_size_b)) > 0.5).astype(jnp.float32)
    m_c = (jax.random.uniform(k3, (B, T, input_size_c)) > 0.3).astype(jnp.float32)
    m_b = (jax.random.uniform(k4, (B, T, input_size_b)) > 0.3).astype(jnp.float32)
    z = jax.random.normal(k5, (B, latent_size), jnp.float32)

    out = decoder_forward(prepared, x_c, x_b, m_c, m_b, z)
    jax.block_until_ready(out)

    ref = decoder_reference(params, x_c, x_b, m_c, m_b, z)
    # Tolerance loosened vs the pure-f32 version: matmul operands are bf16
    # (f32 accumulation), which adds ~1e-2 absolute drift through the LSTM.
    for name in ("alpha", "beta", "bernoulli"):
        assert out[name].shape == ref[name].shape, name
        assert jnp.allclose(out[name], ref[name], atol=2.5e-2, rtol=2.5e-2), name

    print("KERNEL_OK")
</pallas_src>

<mosaic_0001>
module attributes {stable_mosaic.version = 11 : i64} {
  func.func @_decoder_kernel(%arg0: i32, %arg1: memref<8x8x16xbf16, #tpu.memory_space<vmem>>, %arg2: memref<8x16xf32, #tpu.memory_space<vmem>>, %arg3: memref<16x32xf32, #tpu.memory_space<vmem>>, %arg4: memref<1x32xf32, #tpu.memory_space<vmem>>, %arg5: memref<16x128xbf16, #tpu.memory_space<vmem>>, %arg6: memref<1x128xf32, #tpu.memory_space<vmem>>, %arg7: memref<32x128xbf16, #tpu.memory_space<vmem>>, %arg8: memref<32x128xbf16, #tpu.memory_space<vmem>>, %arg9: memref<1x128xf32, #tpu.memory_space<vmem>>, %arg10: memref<8x8x128xf32, #tpu.memory_space<vmem>>, %arg11: memref<8x8x128xf32, #tpu.memory_space<vmem>>, %arg12: memref<8x8x32xbf16, #tpu.memory_space<vmem>>) attributes {dimension_semantics = [#tpu.dimension_semantics<parallel>], iteration_bounds = array<i64: 1>, scalar_prefetch = 0 : i64, scratch_operands = 2 : i64, tpu.core_type = #tpu.core_type<tc>, window_params = [{transform_indices = @transform_0, window_bounds = array<i64: 8, 8, 16>}, {transform_indices = @transform_1, window_bounds = array<i64: 8, 16>}, {pipeline_mode = #tpu.pipeline_mode<synchronous>, transform_indices = @transform_2, window_bounds = array<i64: 16, 32>}, {pipeline_mode = #tpu.pipeline_mode<synchronous>, transform_indices = @transform_3, window_bounds = array<i64: 1, 32>}, {pipeline_mode = #tpu.pipeline_mode<synchronous>, transform_indices = @transform_4, window_bounds = array<i64: 16, 128>}, {pipeline_mode = #tpu.pipeline_mode<synchronous>, transform_indices = @transform_5, window_bounds = array<i64: 1, 128>}, {pipeline_mode = #tpu.pipeline_mode<synchronous>, transform_indices = @transform_6, window_bounds = array<i64: 32, 128>}, {pipeline_mode = #tpu.pipeline_mode<synchronous>, transform_indices = @transform_7, window_bounds = array<i64: 32, 128>}, {pipeline_mode = #tpu.pipeline_mode<synchronous>, transform_indices = @transform_8, window_bounds = array<i64: 1, 128>}, {transform_indices = @transform_9, window_bounds = array<i64: 8, 8, 128>}]} {
    %c0 = arith.constant 0 : index
    %c0_0 = arith.constant 0 : index
    %c0_1 = arith.constant 0 : index
    %0 = vector.load %arg1[%c0, %c0_0, %c0_1] : memref<8x8x16xbf16, #tpu.memory_space<vmem>>, vector<8x8x16xbf16>
    %1 = vector.shape_cast %0 : vector<8x8x16xbf16> to vector<64x16xbf16>
    %c0_2 = arith.constant 0 : index
    %c0_3 = arith.constant 0 : index
    %2 = vector.load %arg5[%c0_2, %c0_3] : memref<16x128xbf16, #tpu.memory_space<vmem>>, vector<16x128xbf16>
    %cst = arith.constant dense<0.000000e+00> : vector<64x128xf32>
    %3 = tpu.matmul %1, %2, %cst {dimension_numbers = #tpu.dot_dimension_numbers<[1], [0], [0], [1], [0, 0, 1, 1], [], []>} : vector<64x16xbf16>, vector<16x128xbf16>, vector<64x128xf32> -> vector<64x128xf32>
    %c0_4 = arith.constant 0 : index
    %c0_5 = arith.constant 0 : index
    %4 = vector.load %arg6[%c0_4, %c0_5] : memref<1x128xf32, #tpu.memory_space<vmem>>, vector<1x128xf32>
    %5 = vector.broadcast %4 : vector<1x128xf32> to vector<64x128xf32>
    %6 = arith.addf %3, %5 : vector<64x128xf32>
    %7 = vector.shape_cast %6 : vector<64x128xf32> to vector<8x8x128xf32>
    %c0_6 = arith.constant 0 : index
    %c0_7 = arith.constant 0 : index
    %c0_8 = arith.constant 0 : index
    %8 = vector.load %arg11[%c0_6, %c0_7, %c0_8] : memref<8x8x128xf32, #tpu.memory_space<vmem>>, vector<8x8x128xf32>
    tpu.vector_store %arg11[%c0_6, %c0_7, %c0_8], %7 {strides = array<i32>} : memref<8x8x128xf32, #tpu.memory_space<vmem>>, vector<8x8x128xf32>,
    %c0_9 = arith.constant 0 : index
    %c0_10 = arith.constant 0 : index
    %9 = vector.load %arg2[%c0_9, %c0_10] : memref<8x16xf32, #tpu.memory_space<vmem>>, vector<8x16xf32>
    %c0_11 = arith.constant 0 : index
    %c0_12 = arith.constant 0 : index
    %10 = vector.load %arg3[%c0_11, %c0_12] : memref<16x32xf32, #tpu.memory_space<vmem>>, vector<16x32xf32>
    %cst_13 = arith.constant dense<0.000000e+00> : vector<8x32xf32>
    %11 = tpu.matmul %9, %10, %cst_13 {dimension_numbers = #tpu.dot_dimension_numbers<[1], [0], [0], [1], [0, 0, 1, 1], [], []>} : vector<8x16xf32>, vector<16x32xf32>, vector<8x32xf32> -> vector<8x32xf32>
    %c0_14 = arith.constant 0 : index
    %c0_15 = arith.constant 0 : index
    %12 = vector.load %arg4[%c0_14, %c0_15] : memref<1x32xf32, #tpu.memory_space<vmem>>, vector<1x32xf32>
    %13 = vector.broadcast %12 : vector<1x32xf32> to vector<8x32xf32>
    %14 = arith.addf %11, %13 : vector<8x32xf32>
    %cst_16 = arith.constant 0.000000e+00 : f32
    %15 = vector.broadcast %cst_16 : f32 to vector<8x32xf32>
    %c0_17 = arith.constant 0 : index
    %c0_18 = arith.constant 0 : index
    %16 = vector.load %arg7[%c0_17, %c0_18] : memref<32x128xbf16, #tpu.memory_space<vmem>>, vector<32x128xbf16>
    %c0_19 = arith.constant 0 : index
    %c0_20 = arith.constant 0 : index
    %c0_21 = arith.constant 0 : index
    %17 = vector.load %arg11[%c0_19, %c0_20, %c0_21] : memref<8x8x128xf32, #tpu.memory_space<vmem>>, vector<1x8x128xf32>
    %18 = vector.shape_cast %17 : vector<1x8x128xf32> to vector<8x128xf32>
    %19 = arith.truncf %14 : vector<8x32xf32> to vector<8x32xbf16>
    %cst_22 = arith.constant dense<0.000000e+00> : vector<8x128xf32>
    %20 = tpu.matmul %19, %16, %cst_22 {dimension_numbers = #tpu.dot_dimension_numbers<[1], [0], [0], [1], [0, 0, 1, 1], [], []>} : vector<8x32xbf16>, vector<32x128xbf16>, vector<8x128xf32> -> vector<8x128xf32>
    %21 = arith.addf %18, %20 : vector<8x128xf32>
    %22 = arith.negf %21 : vector<8x128xf32>
    %23 = math.exp %22 : vector<8x128xf32>
    %cst_23 = arith.constant 1.000000e+00 : f32
    %24 = vector.broadcast %cst_23 : f32 to vector<8x128xf32>
    %25 = arith.addf %24, %23 : vector<8x128xf32>
    %26 = arith.divf %24, %25 : vector<8x128xf32>
    %27 = math.tanh %21 : vector<8x128xf32>
    %28 = vector.extract_strided_slice %26 {offsets = [0, 0], sizes = [8, 32], strides = [1, 1]} : vector<8x128xf32> to vector<8x32xf32>
    %29 = vector.extract_strided_slice %26 {offsets = [0, 32], sizes = [8, 32], strides = [1, 1]} : vector<8x128xf32> to vector<8x32xf32>
    %30 = vector.extract_strided_slice %27 {offsets = [0, 64], sizes = [8, 32], strides = [1, 1]} : vector<8x128xf32> to vector<8x32xf32>
    %31 = vector.extract_strided_slice %26 {offsets = [0, 96], sizes = [8, 32], strides = [1, 1]} : vector<8x128xf32> to vector<8x32xf32>
    %32 = arith.mulf %29, %15 : vector<8x32xf32>
    %33 = arith.mulf %28, %30 : vector<8x32xf32>
    %34 = arith.addf %32, %33 : vector<8x32xf32>
    %35 = math.tanh %34 : vector<8x32xf32>
    %36 = arith.mulf %31, %35 : vector<8x32xf32>
    %37 = arith.truncf %36 : vector<8x32xf32> to vector<8x32xbf16>
    %c0_24 = arith.constant 0 : index
    %c0_25 = arith.constant 0 : index
    %c0_26 = arith.constant 0 : index
    %38 = vector.load %arg12[%c0_24, %c0_25, %c0_26] : memref<8x8x32xbf16, #tpu.memory_space<vmem>>, vector<1x8x32xbf16>
    %39 = vector.shape_cast %38 : vector<1x8x32xbf16> to vector<8x32xbf16>
    %40 = vector.shape_cast %37 : vector<8x32xbf16> to vector<1x8x32xbf16>
    tpu.vector_store %arg12[%c0_24, %c0_25, %c0_26], %40 {strides = array<i32>} : memref<8x8x32xbf16, #tpu.memory_space<vmem>>, vector<1x8x32xbf16>,
    %c1 = arith.constant 1 : index
    %c0_27 = arith.constant 0 : index
    %c0_28 = arith.constant 0 : index
    %41 = vector.load %arg11[%c1, %c0_27, %c0_28] : memref<8x8x128xf32, #tpu.memory_space<vmem>>, vector<1x8x128xf32>
    %42 = vector.shape_cast %41 : vector<1x8x128xf32> to vector<8x128xf32>
    %43 = arith.truncf %36 : vector<8x32xf32> to vector<8x32xbf16>
    %cst_29 = arith.constant dense<0.000000e+00> : vector<8x128xf32>
    %44 = tpu.matmul %43, %16, %cst_29 {dimension_numbers = #tpu.dot_dimension_numbers<[1], [0], [0], [1], [0, 0, 1, 1], [], []>} : vector<8x32xbf16>, vector<32x128xbf16>, vector<8x128xf32> -> vector<8x128xf32>
    %45 = arith.addf %42, %44 : vector<8x128xf32>
    %46 = arith.negf %45 : vector<8x128xf32>
    %47 = math.exp %46 : vector<8x128xf32>
    %cst_30 = arith.constant 1.000000e+00 : f32
    %48 = vector.broadcast %cst_30 : f32 to vector<8x128xf32>
    %49 = arith.addf %48, %47 : vector<8x128xf32>
    %50 = arith.divf %48, %49 : vector<8x128xf32>
    %51 = math.tanh %45 : vector<8x128xf32>
    %52 = vector.extract_strided_slice %50 {offsets = [0, 0], sizes = [8, 32], strides = [1, 1]} : vector<8x128xf32> to vector<8x32xf32>
    %53 = vector.extract_strided_slice %50 {offsets = [0, 32], sizes = [8, 32], strides = [1, 1]} : vector<8x128xf32> to vector<8x32xf32>
    %54 = vector.extract_strided_slice %51 {offsets = [0, 64], sizes = [8, 32], strides = [1, 1]} : vector<8x128xf32> to vector<8x32xf32>
    %55 = vector.extract_strided_slice %50 {offsets = [0, 96], sizes = [8, 32], strides = [1, 1]} : vector<8x128xf32> to vector<8x32xf32>
    %56 = arith.mulf %53, %34 : vector<8x32xf32>
    %57 = arith.mulf %52, %54 : vector<8x32xf32>
    %58 = arith.addf %56, %57 : vector<8x32xf32>
    %59 = math.tanh %58 : vector<8x32xf32>
    %60 = arith.mulf %55, %59 : vector<8x32xf32>
    %61 = arith.truncf %60 : vector<8x32xf32> to vector<8x32xbf16>
    %c1_31 = arith.constant 1 : index
    %c0_32 = arith.constant 0 : index
    %c0_33 = arith.constant 0 : index
    %62 = vector.load %arg12[%c1_31, %c0_32, %c0_33] : memref<8x8x32xbf16, #tpu.memory_space<vmem>>, vector<1x8x32xbf16>
    %63 = vector.shape_cast %62 : vector<1x8x32xbf16> to vector<8x32xbf16>
    %64 = vector.shape_cast %61 : vector<8x32xbf16> to vector<1x8x32xbf16>
    tpu.vector_store %arg12[%c1_31, %c0_32, %c0_33], %64 {strides = array<i32>} : memref<8x8x32xbf16, #tpu.memory_space<vmem>>, vector<1x8x32xbf16>,
    %c2 = arith.constant 2 : index
    %c0_34 = arith.constant 0 : index
    %c0_35 = arith.constant 0 : index
    %65 = vector.load %arg11[%c2, %c0_34, %c0_35] : memref<8x8x128xf32, #tpu.memory_space<vmem>>, vector<1x8x128xf32>
    %66 = vector.shape_cast %65 : vector<1x8x128xf32> to vector<8x128xf32>
    %67 = arith.truncf %60 : vector<8x32xf32> to vector<8x32xbf16>
    %cst_36 = arith.constant dense<0.000000e+00> : vector<8x128xf32>
    %68 = tpu.matmul %67, %16, %cst_36 {dimension_numbers = #tpu.dot_dimension_numbers<[1], [0], [0], [1], [0, 0, 1, 1], [], []>} : vector<8x32xbf16>, vector<32x128xbf16>, vector<8x128xf32> -> vector<8x128xf32>
    %69 = arith.addf %66, %68 : vector<8x128xf32>
    %70 = arith.negf %69 : vector<8x128xf32>
    %71 = math.exp %70 : vector<8x128xf32>
    %cst_37 = arith.constant 1.000000e+00 : f32
    %72 = vector.broadcast %cst_37 : f32 to vector<8x128xf32>
    %73 = arith.addf %72, %71 : vector<8x128xf32>
    %74 = arith.divf %72, %73 : vector<8x128xf32>
    %75 = math.tanh %69 : vector<8x128xf32>
    %76 = vector.extract_strided_slice %74 {offsets = [0, 0], sizes = [8, 32], strides = [1, 1]} : vector<8x128xf32> to vector<8x32xf32>
    %77 = vector.extract_strided_slice %74 {offsets = [0, 32], sizes = [8, 32], strides = [1, 1]} : vector<8x128xf32> to vector<8x32xf32>
    %78 = vector.extract_strided_slice %75 {offsets = [0, 64], sizes = [8, 32], strides = [1, 1]} : vector<8x128xf32> to vector<8x32xf32>
    %79 = vector.extract_strided_slice %74 {offsets = [0, 96], sizes = [8, 32], strides = [1, 1]} : vector<8x128xf32> to vector<8x32xf32>
    %80 = arith.mulf %77, %58 : vector<8x32xf32>
    %81 = arith.mulf %76, %78 : vector<8x32xf32>
    %82 = arith.addf %80, %81 : vector<8x32xf32>
    %83 = math.tanh %82 : vector<8x32xf32>
    %84 = arith.mulf %79, %83 : vector<8x32xf32>
    %85 = arith.truncf %84 : vector<8x32xf32> to vector<8x32xbf16>
    %c2_38 = arith.constant 2 : index
    %c0_39 = arith.constant 0 : index
    %c0_40 = arith.constant 0 : index
    %86 = vector.load %arg12[%c2_38, %c0_39, %c0_40] : memref<8x8x32xbf16, #tpu.memory_space<vmem>>, vector<1x8x32xbf16>
    %87 = vector.shape_cast %86 : vector<1x8x32xbf16> to vector<8x32xbf16>
    %88 = vector.shape_cast %85 : vector<8x32xbf16> to vector<1x8x32xbf16>
    tpu.vector_store %arg12[%c2_38, %c0_39, %c0_40], %88 {strides = array<i32>} : memref<8x8x32xbf16, #tpu.memory_space<vmem>>, vector<1x8x32xbf16>,
    %c3 = arith.constant 3 : index
    %c0_41 = arith.constant 0 : index
    %c0_42 = arith.constant 0 : index
    %89 = vector.load %arg11[%c3, %c0_41, %c0_42] : memref<8x8x128xf32, #tpu.memory_space<vmem>>, vector<1x8x128xf32>
    %90 = vector.shape_cast %89 : vector<1x8x128xf32> to vector<8x128xf32>
    %91 = arith.truncf %84 : vector<8x32xf32> to vector<8x32xbf16>
    %cst_43 = arith.constant dense<0.000000e+00> : vector<8x128xf32>
    %92 = tpu.matmul %91, %16, %cst_43 {dimension_numbers = #tpu.dot_dimension_numbers<[1], [0], [0], [1], [0, 0, 1, 1], [], []>} : vector<8x32xbf16>, vector<32x128xbf16>, vector<8x128xf32> -> vector<8x128xf32>
    %93 = arith.addf %90, %92 : vector<8x128xf32>
    %94 = arith.negf %93 : vector<8x128xf32>
    %95 = math.exp %94 : vector<8x128xf32>
    %cst_44 = arith.constant 1.000000e+00 : f32
    %96 = vector.broadcast %cst_44 : f32 to vector<8x128xf32>
    %97 = arith.addf %96, %95 : vector<8x128xf32>
    %98 = arith.divf %96, %97 : vector<8x128xf32>
    %99 = math.tanh %93 : vector<8x128xf32>
    %100 = vector.extract_strided_slice %98 {offsets = [0, 0], sizes = [8, 32], strides = [1, 1]} : vector<8x128xf32> to vector<8x32xf32>
    %101 = vector.extract_strided_slice %98 {offsets = [0, 32], sizes = [8, 32], strides = [1, 1]} : vector<8x128xf32> to vector<8x32xf32>
    %102 = vector.extract_strided_slice %99 {offsets = [0, 64], sizes = [8, 32], strides = [1, 1]} : vector<8x128xf32> to vector<8x32xf32>
    %103 = vector.extract_strided_slice %98 {offsets = [0, 96], sizes = [8, 32], strides = [1, 1]} : vector<8x128xf32> to vector<8x32xf32>
    %104 = arith.mulf %101, %82 : vector<8x32xf32>
    %105 = arith.mulf %100, %102 : vector<8x32xf32>
    %106 = arith.addf %104, %105 : vector<8x32xf32>
    %107 = math.tanh %106 : vector<8x32xf32>
    %108 = arith.mulf %103, %107 : vector<8x32xf32>
    %109 = arith.truncf %108 : vector<8x32xf32> to vector<8x32xbf16>
    %c3_45 = arith.constant 3 : index
    %c0_46 = arith.constant 0 : index
    %c0_47 = arith.constant 0 : index
    %110 = vector.load %arg12[%c3_45, %c0_46, %c0_47] : memref<8x8x32xbf16, #tpu.memory_space<vmem>>, vector<1x8x32xbf16>
    %111 = vector.shape_cast %110 : vector<1x8x32xbf16> to vector<8x32xbf16>
    %112 = vector.shape_cast %109 : vector<8x32xbf16> to vector<1x8x32xbf16>
    tpu.vector_store %arg12[%c3_45, %c0_46, %c0_47], %112 {strides = array<i32>} : memref<8x8x32xbf16, #tpu.memory_space<vmem>>, vector<1x8x32xbf16>,
    %c4 = arith.constant 4 : index
    %c0_48 = arith.constant 0 : index
    %c0_49 = arith.constant 0 : index
    %113 = vector.load %arg11[%c4, %c0_48, %c0_49] : memref<8x8x128xf32, #tpu.memory_space<vmem>>, vector<1x8x128xf32>
    %114 = vector.shape_cast %113 : vector<1x8x128xf32> to vector<8x128xf32>
    %115 = arith.truncf %108 : vector<8x32xf32> to vector<8x32xbf16>
    %cst_50 = arith.constant dense<0.000000e+00> : vector<8x128xf32>
    %116 = tpu.matmul %115, %16, %cst_50 {dimension_numbers = #tpu.dot_dimension_numbers<[1], [0], [0], [1], [0, 0, 1, 1], [], []>} : vector<8x32xbf16>, vector<32x128xbf16>, vector<8x128xf32> -> vector<8x128xf32>
    %117 = arith.addf %114, %116 : vector<8x128xf32>
    %118 = arith.negf %117 : vector<8x128xf32>
    %119 = math.exp %118 : vector<8x128xf32>
    %cst_51 = arith.constant 1.000000e+00 : f32
    %120 = vector.broadcast %cst_51 : f32 to vector<8x128xf32>
    %121 = arith.addf %120, %119 : vector<8x128xf32>
    %122 = arith.divf %120, %121 : vector<8x128xf32>
    %123 = math.tanh %117 : vector<8x128xf32>
    %124 = vector.extract_strided_slice %122 {offsets = [0, 0], sizes = [8, 32], strides = [1, 1]} : vector<8x128xf32> to vector<8x32xf32>
    %125 = vector.extract_strided_slice %122 {offsets = [0, 32], sizes = [8, 32], strides = [1, 1]} : vector<8x128xf32> to vector<8x32xf32>
    %126 = vector.extract_strided_slice %123 {offsets = [0, 64], sizes = [8, 32], strides = [1, 1]} : vector<8x128xf32> to vector<8x32xf32>
    %127 = vector.extract_strided_slice %122 {offsets = [0, 96], sizes = [8, 32], strides = [1, 1]} : vector<8x128xf32> to vector<8x32xf32>
    %128 = arith.mulf %125, %106 : vector<8x32xf32>
    %129 = arith.mulf %124, %126 : vector<8x32xf32>
    %130 = arith.addf %128, %129 : vector<8x32xf32>
    %131 = math.tanh %130 : vector<8x32xf32>
    %132 = arith.mulf %127, %131 : vector<8x32xf32>
    %133 = arith.truncf %132 : vector<8x32xf32> to vector<8x32xbf16>
    %c4_52 = arith.constant 4 : index
    %c0_53 = arith.constant 0 : index
    %c0_54 = arith.constant 0 : index
    %134 = vector.load %arg12[%c4_52, %c0_53, %c0_54] : memref<8x8x32xbf16, #tpu.memory_space<vmem>>, vector<1x8x32xbf16>
    %135 = vector.shape_cast %134 : vector<1x8x32xbf16> to vector<8x32xbf16>
    %136 = vector.shape_cast %133 : vector<8x32xbf16> to vector<1x8x32xbf16>
    tpu.vector_store %arg12[%c4_52, %c0_53, %c0_54], %136 {strides = array<i32>} : memref<8x8x32xbf16, #tpu.memory_space<vmem>>, vector<1x8x32xbf16>,
    %c5 = arith.constant 5 : index
    %c0_55 = arith.constant 0 : index
    %c0_56 = arith.constant 0 : index
    %137 = vector.load %arg11[%c5, %c0_55, %c0_56] : memref<8x8x128xf32, #tpu.memory_space<vmem>>, vector<1x8x128xf32>
    %138 = vector.shape_cast %137 : vector<1x8x128xf32> to vector<8x128xf32>
    %139 = arith.truncf %132 : vector<8x32xf32> to vector<8x32xbf16>
    %cst_57 = arith.constant dense<0.000000e+00> : vector<8x128xf32>
    %140 = tpu.matmul %139, %16, %cst_57 {dimension_numbers = #tpu.dot_dimension_numbers<[1], [0], [0], [1], [0, 0, 1, 1], [], []>} : vector<8x32xbf16>, vector<32x128xbf16>, vector<8x128xf32> -> vector<8x128xf32>
    %141 = arith.addf %138, %140 : vector<8x128xf32>
    %142 = arith.negf %141 : vector<8x128xf32>
    %143 = math.exp %142 : vector<8x128xf32>
    %cst_58 = arith.constant 1.000000e+00 : f32
    %144 = vector.broadcast %cst_58 : f32 to vector<8x128xf32>
    %145 = arith.addf %144, %143 : vector<8x128xf32>
    %146 = arith.divf %144, %145 : vector<8x128xf32>
    %147 = math.tanh %141 : vector<8x128xf32>
    %148 = vector.extract_strided_slice %146 {offsets = [0, 0], sizes = [8, 32], strides = [1, 1]} : vector<8x128xf32> to vector<8x32xf32>
    %149 = vector.extract_strided_slice %146 {offsets = [0, 32], sizes = [8, 32], strides = [1, 1]} : vector<8x128xf32> to vector<8x32xf32>
    %150 = vector.extract_strided_slice %147 {offsets = [0, 64], sizes = [8, 32], strides = [1, 1]} : vector<8x128xf32> to vector<8x32xf32>
    %151 = vector.extract_strided_slice %146 {offsets = [0, 96], sizes = [8, 32], strides = [1, 1]} : vector<8x128xf32> to vector<8x32xf32>
    %152 = arith.mulf %149, %130 : vector<8x32xf32>
    %153 = arith.mulf %148, %150 : vector<8x32xf32>
    %154 = arith.addf %152, %153 : vector<8x32xf32>
    %155 = math.tanh %154 : vector<8x32xf32>
    %156 = arith.mulf %151, %155 : vector<8x32xf32>
    %157 = arith.truncf %156 : vector<8x32xf32> to vector<8x32xbf16>
    %c5_59 = arith.constant 5 : index
    %c0_60 = arith.constant 0 : index
    %c0_61 = arith.constant 0 : index
    %158 = vector.load %arg12[%c5_59, %c0_60, %c0_61] : memref<8x8x32xbf16, #tpu.memory_space<vmem>>, vector<1x8x32xbf16>
    %159 = vector.shape_cast %158 : vector<1x8x32xbf16> to vector<8x32xbf16>
    %160 = vector.shape_cast %157 : vector<8x32xbf16> to vector<1x8x32xbf16>
    tpu.vector_store %arg12[%c5_59, %c0_60, %c0_61], %160 {strides = array<i32>} : memref<8x8x32xbf16, #tpu.memory_space<vmem>>, vector<1x8x32xbf16>,
    %c6 = arith.constant 6 : index
    %c0_62 = arith.constant 0 : index
    %c0_63 = arith.constant 0 : index
    %161 = vector.load %arg11[%c6, %c0_62, %c0_63] : memref<8x8x128xf32, #tpu.memory_space<vmem>>, vector<1x8x128xf32>
    %162 = vector.shape_cast %161 : vector<1x8x128xf32> to vector<8x128xf32>
    %163 = arith.truncf %156 : vector<8x32xf32> to vector<8x32xbf16>
    %cst_64 = arith.constant dense<0.000000e+00> : vector<8x128xf32>
    %164 = tpu.matmul %163, %16, %cst_64 {dimension_numbers = #tpu.dot_dimension_numbers<[1], [0], [0], [1], [0, 0, 1, 1], [], []>} : vector<8x32xbf16>, vector<32x128xbf16>, vector<8x128xf32> -> vector<8x128xf32>
    %165 = arith.addf %162, %164 : vector<8x128xf32>
    %166 = arith.negf %165 : vector<8x128xf32>
    %167 = math.exp %166 : vector<8x128xf32>
    %cst_65 = arith.constant 1.000000e+00 : f32
    %168 = vector.broadcast %cst_65 : f32 to vector<8x128xf32>
    %169 = arith.addf %168, %167 : vector<8x128xf32>
    %170 = arith.divf %168, %169 : vector<8x128xf32>
    %171 = math.tanh %165 : vector<8x128xf32>
    %172 = vector.extract_strided_slice %170 {offsets = [0, 0], sizes = [8, 32], strides = [1, 1]} : vector<8x128xf32> to vector<8x32xf32>
    %173 = vector.extract_strided_slice %170 {offsets = [0, 32], sizes = [8, 32], strides = [1, 1]} : vector<8x128xf32> to vector<8x32xf32>
    %174 = vector.extract_strided_slice %171 {offsets = [0, 64], sizes = [8, 32], strides = [1, 1]} : vector<8x128xf32> to vector<8x32xf32>
    %175 = vector.extract_strided_slice %170 {offsets = [0, 96], sizes = [8, 32], strides = [1, 1]} : vector<8x128xf32> to vector<8x32xf32>
    %176 = arith.mulf %173, %154 : vector<8x32xf32>
    %177 = arith.mulf %172, %174 : vector<8x32xf32>
    %178 = arith.addf %176, %177 : vector<8x32xf32>
    %179 = math.tanh %178 : vector<8x32xf32>
    %180 = arith.mulf %175, %179 : vector<8x32xf32>
    %181 = arith.truncf %180 : vector<8x32xf32> to vector<8x32xbf16>
    %c6_66 = arith.constant 6 : index
    %c0_67 = arith.constant 0 : index
    %c0_68 = arith.constant 0 : index
    %182 = vector.load %arg12[%c6_66, %c0_67, %c0_68] : memref<8x8x32xbf16, #tpu.memory_space<vmem>>, vector<1x8x32xbf16>
    %183 = vector.shape_cast %182 : vector<1x8x32xbf16> to vector<8x32xbf16>
    %184 = vector.shape_cast %181 : vector<8x32xbf16> to vector<1x8x32xbf16>
    tpu.vector_store %arg12[%c6_66, %c0_67, %c0_68], %184 {strides = array<i32>} : memref<8x8x32xbf16, #tpu.memory_space<vmem>>, vector<1x8x32xbf16>,
    %c7 = arith.constant 7 : index
    %c0_69 = arith.constant 0 : index
    %c0_70 = arith.constant 0 : index
    %185 = vector.load %arg11[%c7, %c0_69, %c0_70] : memref<8x8x128xf32, #tpu.memory_space<vmem>>, vector<1x8x128xf32>
    %186 = vector.shape_cast %185 : vector<1x8x128xf32> to vector<8x128xf32>
    %187 = arith.truncf %180 : vector<8x32xf32> to vector<8x32xbf16>
    %cst_71 = arith.constant dense<0.000000e+00> : vector<8x128xf32>
    %188 = tpu.matmul %187, %16, %cst_71 {dimension_numbers = #tpu.dot_dimension_numbers<[1], [0], [0], [1], [0, 0, 1, 1], [], []>} : vector<8x32xbf16>, vector<32x128xbf16>, vector<8x128xf32> -> vector<8x128xf32>
    %189 = arith.addf %186, %188 : vector<8x128xf32>
    %190 = arith.negf %189 : vector<8x128xf32>
    %191 = math.exp %190 : vector<8x128xf32>
    %cst_72 = arith.constant 1.000000e+00 : f32
    %192 = vector.broadcast %cst_72 : f32 to vector<8x128xf32>
    %193 = arith.addf %192, %191 : vector<8x128xf32>
    %194 = arith.divf %192, %193 : vector<8x128xf32>
    %195 = math.tanh %189 : vector<8x128xf32>
    %196 = vector.extract_strided_slice %194 {offsets = [0, 0], sizes = [8, 32], strides = [1, 1]} : vector<8x128xf32> to vector<8x32xf32>
    %197 = vector.extract_strided_slice %194 {offsets = [0, 32], sizes = [8, 32], strides = [1, 1]} : vector<8x128xf32> to vector<8x32xf32>
    %198 = vector.extract_strided_slice %195 {offsets = [0, 64], sizes = [8, 32], strides = [1, 1]} : vector<8x128xf32> to vector<8x32xf32>
    %199 = vector.extract_strided_slice %194 {offsets = [0, 96], sizes = [8, 32], strides = [1, 1]} : vector<8x128xf32> to vector<8x32xf32>
    %200 = arith.mulf %197, %178 : vector<8x32xf32>
    %201 = arith.mulf %196, %198 : vector<8x32xf32>
    %202 = arith.addf %200, %201 : vector<8x32xf32>
    %203 = math.tanh %202 : vector<8x32xf32>
    %204 = arith.mulf %199, %203 : vector<8x32xf32>
    %205 = arith.truncf %204 : vector<8x32xf32> to vector<8x32xbf16>
    %c7_73 = arith.constant 7 : index
    %c0_74 = arith.constant 0 : index
    %c0_75 = arith.constant 0 : index
    %206 = vector.load %arg12[%c7_73, %c0_74, %c0_75] : memref<8x8x32xbf16, #tpu.memory_space<vmem>>, vector<1x8x32xbf16>
    %207 = vector.shape_cast %206 : vector<1x8x32xbf16> to vector<8x32xbf16>
    %208 = vector.shape_cast %205 : vector<8x32xbf16> to vector<1x8x32xbf16>
    tpu.vector_store %arg12[%c7_73, %c0_74, %c0_75], %208 {strides = array<i32>} : memref<8x8x32xbf16, #tpu.memory_space<vmem>>, vector<1x8x32xbf16>,
    %c0_76 = arith.constant 0 : index
    %c0_77 = arith.constant 0 : index
    %c0_78 = arith.constant 0 : index
    %209 = vector.load %arg12[%c0_76, %c0_77, %c0_78] : memref<8x8x32xbf16, #tpu.memory_space<vmem>>, vector<8x8x32xbf16>
    %210 = vector.shape_cast %209 : vector<8x8x32xbf16> to vector<64x32xbf16>
    %c0_79 = arith.constant 0 : index
    %c0_80 = arith.constant 0 : index
    %211 = vector.load %arg8[%c0_79, %c0_80] : memref<32x128xbf16, #tpu.memory_space<vmem>>, vector<32x128xbf16>
    %cst_81 = arith.constant dense<0.000000e+00> : vector<64x128xf32>
    %212 = tpu.matmul %210, %211, %cst_81 {dimension_numbers = #tpu.dot_dimension_numbers<[1], [0], [0], [1], [0, 0, 1, 1], [], []>} : vector<64x32xbf16>, vector<32x128xbf16>, vector<64x128xf32> -> vector<64x128xf32>
    %c0_82 = arith.constant 0 : index
    %c0_83 = arith.constant 0 : index
    %213 = vector.load %arg9[%c0_82, %c0_83] : memref<1x128xf32, #tpu.memory_space<vmem>>, vector<1x128xf32>
    %214 = vector.broadcast %213 : vector<1x128xf32> to vector<64x128xf32>
    %215 = arith.addf %212, %214 : vector<64x128xf32>
    %216 = tpu.iota {dimensions = array<i32: 1>} : vector<64x128xi32>
    %c8_i32 = arith.constant 8 : i32
    %217 = vector.broadcast %c8_i32 : i32 to vector<64x128xi32>
    %218 = arith.cmpi slt, %216, %217 : vector<64x128xi32>
    %cst_84 = arith.constant 2.000000e+01 : f32
    %219 = vector.broadcast %cst_84 : f32 to vector<64x128xf32>
    %220 = arith.cmpf ogt, %215, %219 : vector<64x128xf32>
    %cst_85 = arith.constant 2.000000e+01 : f32
    %221 = vector.broadcast %cst_85 : f32 to vector<64x128xf32>
    %222 = arith.minimumf %215, %221 : vector<64x128xf32>
    %223 = math.exp %222 : vector<64x128xf32>
    %224 = math.log1p %223 : vector<64x128xf32>
    %225 = arith.select %220, %215, %224 : vector<64x128xi1>, vector<64x128xf32>
    %226 = arith.select %218, %225, %215 : vector<64x128xi1>, vector<64x128xf32>
    %227 = vector.shape_cast %226 : vector<64x128xf32> to vector<8x8x128xf32>
    %c0_86 = arith.constant 0 : index
    %c0_87 = arith.constant 0 : index
    %c0_88 = arith.constant 0 : index
    %228 = vector.load %arg10[%c0_86, %c0_87, %c0_88] : memref<8x8x128xf32, #tpu.memory_space<vmem>>, vector<8x8x128xf32>
    tpu.vector_store %arg10[%c0_86, %c0_87, %c0_88], %227 {strides = array<i32>} : memref<8x8x128xf32, #tpu.memory_space<vmem>>, vector<8x8x128xf32>,
    return
  }
  func.func @transform_0(%arg0: i32) -> (i32, i32, i32) {
    %c0_i32 = arith.constant 0 : i32
    %c0_i32_0 = arith.constant 0 : i32
    %c0_i32_1 = arith.constant 0 : i32
    return %c0_i32, %arg0, %c0_i32_0 : i32, i32, i32
  }
  func.func @transform_1(%arg0: i32) -> (i32, i32) {
    %c0_i32 = arith.constant 0 : i32
    %c0_i32_0 = arith.constant 0 : i32
    return %arg0, %c0_i32 : i32, i32
  }
  func.func @transform_2(%arg0: i32) -> (i32, i32) {
    %c0_i32 = arith.constant 0 : i32
    %c0_i32_0 = arith.constant 0 : i32
    %c0_i32_1 = arith.constant 0 : i32
    return %c0_i32, %c0_i32_0 : i32, i32
  }
  func.func @transform_3(%arg0: i32) -> (i32, i32) {
    %c0_i32 = arith.constant 0 : i32
    %c0_i32_0 = arith.constant 0 : i32
    %c0_i32_1 = arith.constant 0 : i32
    return %c0_i32, %c0_i32_0 : i32, i32
  }
  func.func @transform_4(%arg0: i32) -> (i32, i32) {
    %c0_i32 = arith.constant 0 : i32
    %c0_i32_0 = arith.constant 0 : i32
    %c0_i32_1 = arith.constant 0 : i32
    return %c0_i32, %c0_i32_0 : i32, i32
  }
  func.func @transform_5(%arg0: i32) -> (i32, i32) {
    %c0_i32 = arith.constant 0 : i32
    %c0_i32_0 = arith.constant 0 : i32
    %c0_i32_1 = arith.constant 0 : i32
    return %c0_i32, %c0_i32_0 : i32, i32
  }
  func.func @transform_6(%arg0: i32) -> (i32, i32) {
    %c0_i32 = arith.constant 0 : i32
    %c0_i32_0 = arith.constant 0 : i32
    %c0_i32_1 = arith.constant 0 : i32
    return %c0_i32, %c0_i32_0 : i32, i32
  }
  func.func @transform_7(%arg0: i32) -> (i32, i32) {
    %c0_i32 = arith.constant 0 : i32
    %c0_i32_0 = arith.constant 0 : i32
    %c0_i32_1 = arith.constant 0 : i32
    return %c0_i32, %c0_i32_0 : i32, i32
  }
  func.func @transform_8(%arg0: i32) -> (i32, i32) {
    %c0_i32 = arith.constant 0 : i32
    %c0_i32_0 = arith.constant 0 : i32
    %c0_i32_1 = arith.constant 0 : i32
    return %c0_i32, %c0_i32_0 : i32, i32
  }
  func.func @transform_9(%arg0: i32) -> (i32, i32, i32) {
    %c0_i32 = arith.constant 0 : i32
    %c0_i32_0 = arith.constant 0 : i32
    %c0_i32_1 = arith.constant 0 : i32
    return %c0_i32, %arg0, %c0_i32_0 : i32, i32, i32
  }
}

</mosaic_0001>

<llo_original>
// kernel: reverse.2
$region0: #{reverse.2}
  #allocation0 [shape = 's32[1]{0}', space=sflag, size = 0x4, scoped, tag = 'scoped memory for reverse.2']
  %s0 = inlined_call_operand.vmem [shape: f32[2,8,4], index: 0, kind: input, shape index: {}]
  %s1 = inlined_call_operand.vmem [shape: f32[2,8,4], index: 1, kind: output, shape index: {}]
  %s2 = scalar_lea.vmem %s0, 14
  %v3 = vld [vmem:[%s2] sm:$0x3]
  %4 = vst [vmem:[%s1] sm:$0x3] %v3
  %s5 = scalar_lea.vmem %s0, 12
  %v6 = vld [vmem:[%s5] sm:$0x3]
  %s7 = scalar_lea.vmem %s1, 2
  %8 = vst [vmem:[%s7] sm:$0x3] %v6
  %s9 = scalar_lea.vmem %s0, 10
  %v10 = vld [vmem:[%s9] sm:$0x3]
  %s11 = scalar_lea.vmem %s1, 4
  %12 = vst [vmem:[%s11] sm:$0x3] %v10
  %s13 = scalar_lea.vmem %s0, 8
  %v14 = vld [vmem:[%s13] sm:$0x3]
  %s15 = scalar_lea.vmem %s1, 6
  %16 = vst [vmem:[%s15] sm:$0x3] %v14
  %s17 = scalar_lea.vmem %s0, 6
  %v18 = vld [vmem:[%s17] sm:$0x3]
  %s19 = scalar_lea.vmem %s1, 8
  %20 = vst [vmem:[%s19] sm:$0x3] %v18
  %s21 = scalar_lea.vmem %s0, 4
  %v22 = vld [vmem:[%s21] sm:$0x3]
  %s23 = scalar_lea.vmem %s1, 10
  %24 = vst [vmem:[%s23] sm:$0x3] %v22
  %s25 = scalar_lea.vmem %s0, 2
  %v26 = vld [vmem:[%s25] sm:$0x3]
  %s27 = scalar_lea.vmem %s1, 12
  %28 = vst [vmem:[%s27] sm:$0x3] %v26
  %v29 = vld [vmem:[%s0] sm:$0x3]
  %s30 = scalar_lea.vmem %s1, 14
  %31 = vst [vmem:[%s30] sm:$0x3] %v29

// kernel: decoder_forward.1
$region0: #{decoder_forward.1}
  #allocation0 [shape = 'u32[]', space=smem, size = 0x4, offset = 0x4, fixed_abs, tag = 'smem constant byte address 0x4 - core index']
  #allocation1 [shape = 'u32[72,128]{1,0:T(1,128)}', space=vmem, size = 0x9000, scoped, tag = 'internal scratch']
  #allocation2 [shape = 'f32[8,8,128]{2,1,0:T(8,128)}', space=vmem, size = 0x8000, scoped, tag = 'scratch operand']
  #allocation3 [shape = 'bf16[8,8,32]{2,1,0:T(8,128)(2,1)}', space=vmem, size = 0x4000, scoped, tag = 'scratch operand']
  %s0 = inlined_call_operand.vmem [shape: bf16[8,8,16], index: 0, kind: input, shape index: {}]
  %s1 = inlined_call_operand.vmem [shape: f32[8,16], index: 1, kind: input, shape index: {}]
  %s2 = inlined_call_operand.vmem [shape: f32[16,32], index: 2, kind: input, shape index: {}]
  %s3 = inlined_call_operand.vmem [shape: f32[1,32], index: 3, kind: input, shape index: {}]
  %s4 = inlined_call_operand.vmem [shape: bf16[16,128], index: 4, kind: input, shape index: {}]
  %s5 = inlined_call_operand.vmem [shape: f32[1,128], index: 5, kind: input, shape index: {}]
  %s6 = inlined_call_operand.vmem [shape: bf16[32,128], index: 6, kind: input, shape index: {}]
  %s7 = inlined_call_operand.vmem [shape: bf16[32,128], index: 7, kind: input, shape index: {}]
  %s8 = inlined_call_operand.vmem [shape: f32[1,128], index: 8, kind: input, shape index: {}]
  %s9 = inlined_call_operand.vmem [shape: f32[8,8,128], index: 9, kind: output, shape index: {}]
  %s10 = sld [smem:[#allocation0]]
  $region46: #{decoder_forward.1} parent=0
    _
  %s12 = ssub.s32 1, %s10
  %s13 = scalar_select 0, %s12, %s10
  // Predicated region
  $region2: #{decoder_forward.1} parent=0 // pred_check
    _
  $region3: #{decoder_forward.1} parent=0 // pred_check_branch
    %15 = sbr.rel (0) target = $region5
  $region4: #{decoder_forward.1} parent=0 // pred_region
    _
  $region5: #{decoder_forward.1} parent=0 // pred_fallthru
    _
  // Predicated region
  $region6: #{decoder_forward.1} parent=0 // pred_check
    _
  $region7: #{decoder_forward.1} parent=0 // pred_check_branch
    %17 = sbr.rel (0) target = $region9
  $region8: #{decoder_forward.1} parent=0 // pred_region
    _
  $region9: #{decoder_forward.1} parent=0 // pred_fallthru
    _
  // Predicated region
  $region10: #{decoder_forward.1} parent=0 // pred_check
    _
  $region11: #{decoder_forward.1} parent=0 // pred_check_branch
    %19 = sbr.rel (0) target = $region13
  $region12: #{decoder_forward.1} parent=0 // pred_region
    _
  $region13: #{decoder_forward.1} parent=0 // pred_fallthru
    _
  // Predicated region
  $region14: #{decoder_forward.1} parent=0 // pred_check
    _
  $region15: #{decoder_forward.1} parent=0 // pred_check_branch
    %21 = sbr.rel (0) target = $region17
  $region16: #{decoder_forward.1} parent=0 // pred_region
    _
  $region17: #{decoder_forward.1} parent=0 // pred_fallthru
    _
  // Predicated region
  $region18: #{decoder_forward.1} parent=0 // pred_check
    _
  $region19: #{decoder_forward.1} parent=0 // pred_check_branch
    %23 = sbr.rel (0) target = $region21
  $region20: #{decoder_forward.1} parent=0 // pred_region
    _
  $region21: #{decoder_forward.1} parent=0 // pred_fallthru
    _
  // Predicated region
  $region22: #{decoder_forward.1} parent=0 // pred_check
    _
  $region23: #{decoder_forward.1} parent=0 // pred_check_branch
    %25 = sbr.rel (0) target = $region25
  $region24: #{decoder_forward.1} parent=0 // pred_region
    _
  $region25: #{decoder_forward.1} parent=0 // pred_fallthru
    _
  // Predicated region
  $region26: #{decoder_forward.1} parent=0 // pred_check
    _
  $region27: #{decoder_forward.1} parent=0 // pred_check_branch
    %27 = sbr.rel (0) target = $region29
  $region28: #{decoder_forward.1} parent=0 // pred_region
    _
  $region29: #{decoder_forward.1} parent=0 // pred_fallthru
    _
  // Predicated region
  $region30: #{decoder_forward.1} parent=0 // pred_check
    _
  $region31: #{decoder_forward.1} parent=0 // pred_check_branch
    %29 = sbr.rel (0) target = $region33
  $region32: #{decoder_forward.1} parent=0 // pred_region
    _
  $region33: #{decoder_forward.1} parent=0 // pred_fallthru
    _
  // Predicated region
  $region34: #{decoder_forward.1} parent=0 // pred_check
    _
  $region35: #{decoder_forward.1} parent=0 // pred_check_branch
    %31 = sbr.rel (0) target = $region37
  $region36: #{decoder_forward.1} parent=0 // pred_region
    _
  $region37: #{decoder_forward.1} parent=0 // pred_fallthru
    _
  %v33 = vld [vmem:[%s0] sm:$0xf]
  %v34 = vld [vmem:[%s0 + $0x4] sm:$0xf]
  %v35 = vld [vmem:[%s0 + $0x8] sm:$0xf]
  %v36 = vld [vmem:[%s0 + $0xc] sm:$0xf]
  %v37 = vld [vmem:[%s0 + $0x10] sm:$0xf]
  %v38 = vld [vmem:[%s0 + $0x14] sm:$0xf]
  %v39 = vld [vmem:[%s0 + $0x18] sm:$0xf]
  %v40 = vld [vmem:[%s0 + $0x1c] sm:$0xf]
  %v41 = vld [vmem:[%s4] sm:$0xf]
  %v42 = vld [vmem:[%s4 + $0x4] sm:$0xf]
  %v43 = vld [vmem:[%s5] sm:$0x1]
  %v45 = vperm.slane %v43, 0
  %v55 = vunpack.c.l.b16 %v33
  %v56 = vunpack.c.l.b16 %v34
  %v57 = vunpack.c.l.b16 %v35
  %v58 = vunpack.c.l.b16 %v36
  %v59 = vunpack.c.l.b16 %v37
  %v60 = vunpack.c.l.b16 %v38
  %v61 = vunpack.c.l.b16 %v39
  %v62 = vunpack.c.l.b16 %v40
  %v63 = vpack.c.b16 %v56, %v55
  %v64 = vpack.c.b16 %v58, %v57
  %v65 = vpack.c.b16 %v60, %v59
  %v66 = vpack.c.b16 %v62, %v61
  %v69 = vunpack.c.l.b16 %v41
  %v70 = vunpack.c.l.b16 %v42
  %v71 = vpack.c.b16 %v70, %v69
  %vm73 = vcmask 130048
  %v75 = vsel %vm73, %v63, 0
  %v78 = vsel %vm73, %v64, 0
  %v81 = vsel %vm73, %v65, 0
  %v84 = vsel %vm73, %v66, 0
  %86 = vmatpush.bf16.msra.mxu0 0
  %87 = vmatpush.bf16.msra.mxu0 0
  %88 = vmatpush.bf16.msra.mxu0 0
  %89 = vmatpush.bf16.msra.mxu0 0
  %90 = vmatpush.bf16.msra.mxu0 0
  %91 = vmatpush.bf16.msra.mxu0 0
  %92 = vmatpush.bf16.msra.mxu0 0
  %93 = vmatpush.bf16.msra.mxu0 %v71
  %94 = vmatmul.bf16.gmra.mxu0 %v75
  %v95 = vpop.f32.mrf.mxu0
  %v96 = vadd.f32 %v45, %v95
  %v97 = vpop.f32.mrf.mxu0
  %v98 = vadd.f32 %v45, %v97
  %99 = vmatmul.bf16.gmra.mxu0 %v78
  %v100 = vpop.f32.mrf.mxu0
  %v101 = vadd.f32 %v45, %v100
  %v102 = vpop.f32.mrf.mxu0
  %v103 = vadd.f32 %v45, %v102
  %104 = vmatmul.bf16.gmra.mxu0 %v81
  %v105 = vpop.f32.mrf.mxu0
  %v106 = vadd.f32 %v45, %v105
  %v107 = vpop.f32.mrf.mxu0
  %v108 = vadd.f32 %v45, %v107
  %109 = vmatmul.bf16.gmra.mxu0 %v84
  %v110 = vpop.f32.mrf.mxu0
  %v111 = vadd.f32 %v45, %v110
  %v112 = vpop.f32.mrf.mxu0
  %v113 = vadd.f32 %v45, %v112
  %114 = vdwg.mxu0
  %115 = vst [vmem:[#allocation2] sm:$0xff] %v96
  %116 = vst [vmem:[#allocation2 + $0x8] sm:$0xff] %v98
  %117 = vst [vmem:[#allocation2 + $0x10] sm:$0xff] %v101
  %118 = vst [vmem:[#allocation2 + $0x18] sm:$0xff] %v103
  %119 = vst [vmem:[#allocation2 + $0x20] sm:$0xff] %v106
  %120 = vst [vmem:[#allocation2 + $0x28] sm:$0xff] %v108
  %121 = vst [vmem:[#allocation2 + $0x30] sm:$0xff] %v111
  %122 = vst [vmem:[#allocation2 + $0x38] sm:$0xff] %v113
  %v123 = vld [vmem:[%s1] sm:$0xff]
  %v124 = vld [vmem:[%s2] sm:$0xff]
  %v125 = vld [vmem:[%s2 + $0x8] sm:$0xff]
  %v126 = vld [vmem:[%s3] sm:$0x1]
  %v128 = vperm.slane %v126, 0
  %v131 = vsel %vm73, %v123, 0
  %133 = vmatpush.msra.mxu0 0.0
  %134 = vmatpush.msra.mxu0 0.0
  %135 = vmatpush.msra.mxu0 0.0
  %136 = vmatpush.msra.mxu0 0.0
  %137 = vmatpush.msra.mxu0 0.0
  %138 = vmatpush.msra.mxu0 0.0
  %139 = vmatpush.msra.mxu0 0.0
  %140 = vmatpush.msra.mxu0 0.0
  %141 = vmatpush.msra.mxu0 0.0
  %142 = vmatpush.msra.mxu0 0.0
  %143 = vmatpush.msra.mxu0 0.0
  %144 = vmatpush.msra.mxu0 0.0
  %145 = vmatpush.msra.mxu0 0.0
  %146 = vmatpush.msra.mxu0 0.0
  %147 = vmatpush.msra.mxu0 %v125
  %148 = vmatpush.msra.mxu0 %v124
  %149 = vmatmul.f32.gmra.mxu0 %v131
  %v150 = vpop.f32.mrf.mxu0
  %v151 = vadd.f32 %v128, %v150
  %152 = vdwg.mxu0
  %v153 = vld [vmem:[%s6] sm:$0xf]
  %v154 = vld [vmem:[%s6 + $0x4] sm:$0xf]
  %v155 = vld [vmem:[%s6 + $0x8] sm:$0xf]
  %v156 = vld [vmem:[%s6 + $0xc] sm:$0xf]
  %v157 = vld [vmem:[#allocation2] sm:$0xff]
  %v158 = vpack.c.bf16 %v151, %v151
  %v163 = vunpack.c.l.b16 %v153
  %v164 = vunpack.c.l.b16 %v154
  %v165 = vunpack.c.l.b16 %v155
  %v166 = vunpack.c.l.b16 %v156
  %v167 = vpack.c.b16 %v164, %v163
  %v168 = vpack.c.b16 %v166, %v165
  %vm171 = vcmask 261120
  %v173 = vsel %vm171, %v158, 0
  %175 = vmatpush.bf16.msra.mxu0 0
  %176 = vmatpush.bf16.msra.mxu0 0
  %177 = vmatpush.bf16.msra.mxu0 0
  %178 = vmatpush.bf16.msra.mxu0 0
  %179 = vmatpush.bf16.msra.mxu0 0
  %180 = vmatpush.bf16.msra.mxu0 0
  %181 = vmatpush.bf16.msra.mxu0 %v168
  %182 = vmatpush.bf16.msra.mxu0 %v167
  %183 = vmatmul.bf16.gmra.mxu0 %v173
  %v184 = vpop.f32.mrf.mxu0
  %v185 = vadd.f32 0.0, %v184
  %v186 = vpop.f32.mrf.mxu0
  %187 = vdwg.mxu0
  %v188 = vadd.f32 %v157, %v185
  %v189 = vxor.u32 %v188, 2147483648
  %v190 = vmul.f32 %v189, 1.442695
  %v191 = vpow.pop %v190
  %v192 = vadd.f32 %v191, 1.0
  %v193 = vrcp.pop %v192
  %v194 = vmul.f32 %v192, %v193
  %v195 = vsub.f32 1.0, %v194
  %v196 = vmul.f32 %v193, %v195
  %v197 = vadd.f32 %v193, %v196
  %vm198 = vweird.f32 %v192
  %vm199 = vweird.f32 %v193
  %vm200 = vmor %vm198, %vm199
  %v201 = vsel %vm200, %v193, %v197
  %v202 = vand.u32 2147483647, %v192
  %vm203 = vcmp.eq.f32.partialorder %v202, 8.507059e+37
  %v204 = vand.u32 %v192, 2147483648
  %v205 = vor.u32 1.1754944e-38, %v204
  %v206 = vsel %vm203, %v205, %v201
  %v207 = vmul.f32 1.0, %v206
  %v208 = vtanh.pop %v188
  %v209 = vmul.f32 %v207, 0.0
  %211 = vrot.lane.b32.xlu0 %v208, 64
  %v212 = vpop.permute.xlu0 %211
  %v214 = vmul.f32 %v207, %v212
  %216 = vrot.lane.b32.xlu0 %v214, 32
  %v217 = vpop.permute.xlu0 %216
  %v219 = vadd.f32 %v209, %v217
  %v220 = vtanh.pop %v219
  %222 = vrot.lane.b32.xlu0 %v220, 64
  %v223 = vpop.permute.xlu0 %222
  %v225 = vmul.f32 %v207, %v223
  %v226 = vpack.c.bf16 %v225, %v225
  %228 = vrot.lane.b32.xlu0 %v226, 32
  %v229 = vpop.permute.xlu0 %228
  %vm231 = vcmask 257024
  %232 = vst.msk [vmem:[#allocation3] sm:$0xf] %vm231, %v229
  %s233 = scalar_lea.vmem [#allocation2], 8
  %v234 = vld [vmem:[%s233] sm:$0xff]
  %v235 = vunpack.c.l.b16 %v226
  %v236 = vpack.c.b16 %v235, %v235
  %237 = vrot.lane.b32.xlu0 %v236, 32
  %v238 = vpop.permute.xlu0 %237
  %v240 = vsel %vm171, %v238, 0
  %242 = vmatpush.bf16.msra.mxu0 0
  %243 = vmatpush.bf16.msra.mxu0 0
  %244 = vmatpush.bf16.msra.mxu0 0
  %245 = vmatpush.bf16.msra.mxu0 0
  %246 = vmatpush.bf16.msra.mxu0 0
  %247 = vmatpush.bf16.msra.mxu0 0
  %248 = vmatpush.bf16.msra.mxu0 %v168
  %249 = vmatpush.bf16.msra.mxu0 %v167
  %250 = vmatmul.bf16.gmra.mxu0 %v240
  %v251 = vpop.f32.mrf.mxu0
  %v252 = vadd.f32 0.0, %v251
  %v253 = vpop.f32.mrf.mxu0
  %254 = vdwg.mxu0
  %v255 = vadd.f32 %v234, %v252
  %v256 = vxor.u32 %v255, 2147483648
  %v257 = vmul.f32 %v256, 1.442695
  %v258 = vpow.pop %v257
  %v259 = vadd.f32 %v258, 1.0
  %v260 = vrcp.pop %v259
  %v261 = vmul.f32 %v259, %v260
  %v262 = vsub.f32 1.0, %v261
  %v263 = vmul.f32 %v260, %v262
  %v264 = vadd.f32 %v260, %v263
  %vm265 = vweird.f32 %v259
  %vm266 = vweird.f32 %v260
  %vm267 = vmor %vm265, %vm266
  %v268 = vsel %vm267, %v260, %v264
  %v269 = vand.u32 2147483647, %v259
  %vm270 = vcmp.eq.f32.partialorder %v269, 8.507059e+37
  %v271 = vand.u32 %v259, 2147483648
  %v272 = vor.u32 1.1754944e-38, %v271
  %v273 = vsel %vm270, %v272, %v268
  %v274 = vmul.f32 1.0, %v273
  %v275 = vtanh.pop %v255
  %v276 = vmul.f32 %v274, %v219
  %278 = vrot.lane.b32.xlu0 %v275, 64
  %v279 = vpop.permute.xlu0 %278
  %v281 = vmul.f32 %v274, %v279
  %283 = vrot.lane.b32.xlu0 %v281, 32
  %v284 = vpop.permute.xlu0 %283
  %v286 = vadd.f32 %v276, %v284
  %v287 = vtanh.pop %v286
  %289 = vrot.lane.b32.xlu0 %v287, 64
  %v290 = vpop.permute.xlu0 %289
  %v292 = vmul.f32 %v274, %v290
  %v293 = vpack.c.bf16 %v292, %v292
  %295 = vrot.lane.b32.xlu0 %v293, 32
  %v296 = vpop.permute.xlu0 %295
  %s298 = scalar_lea.vmem [#allocation3], 4
  %299 = vst.msk [vmem:[%s298] sm:$0xf] %vm231, %v296
  %s300 = scalar_lea.vmem [#allocation2], 16
  %v301 = vld [vmem:[%s300] sm:$0xff]
  %v302 = vunpack.c.l.b16 %v293
  %v303 = vpack.c.b16 %v302, %v302
  %304 = vrot.lane.b32.xlu0 %v303, 32
  %v305 = vpop.permute.xlu0 %304
  %v307 = vsel %vm171, %v305, 0
  %309 = vmatpush.bf16.msra.mxu0 0
  %310 = vmatpush.bf16.msra.mxu0 0
  %311 = vmatpush.bf16.msra.mxu0 0
  %312 = vmatpush.bf16.msra.mxu0 0
  %313 = vmatpush.bf16.msra.mxu0 0
  %314 = vmatpush.bf16.msra.mxu0 0
  %315 = vmatpush.bf16.msra.mxu0 %v168
  %316 = vmatpush.bf16.msra.mxu0 %v167
  %317 = vmatmul.bf16.gmra.mxu0 %v307
  %v318 = vpop.f32.mrf.mxu0
  %v319 = vadd.f32 0.0, %v318
  %v320 = vpop.f32.mrf.mxu0
  %321 = vdwg.mxu0
  %v322 = vadd.f32 %v301, %v319
  %v323 = vxor.u32 %v322, 2147483648
  %v324 = vmul.f32 %v323, 1.442695
  %v325 = vpow.pop %v324
  %v326 = vadd.f32 %v325, 1.0
  %v327 = vrcp.pop %v326
  %v328 = vmul.f32 %v326, %v327
  %v329 = vsub.f32 1.0, %v328
  %v330 = vmul.f32 %v327, %v329
  %v331 = vadd.f32 %v327, %v330
  %vm332 = vweird.f32 %v326
  %vm333 = vweird.f32 %v327
  %vm334 = vmor %vm332, %vm333
  %v335 = vsel %vm334, %v327, %v331
  %v336 = vand.u32 2147483647, %v326
  %vm337 = vcmp.eq.f32.partialorder %v336, 8.507059e+37
  %v338 = vand.u32 %v326, 2147483648
  %v339 = vor.u32 1.1754944e-38, %v338
  %v340 = vsel %vm337, %v339, %v335
  %v341 = vmul.f32 1.0, %v340
  %v342 = vtanh.pop %v322
  %v343 = vmul.f32 %v341, %v286
  %345 = vrot.lane.b32.xlu0 %v342, 64
  %v346 = vpop.permute.xlu0 %345
  %v348 = vmul.f32 %v341, %v346
  %350 = vrot.lane.b32.xlu0 %v348, 32
  %v351 = vpop.permute.xlu0 %350
  %v353 = vadd.f32 %v343, %v351
  %v354 = vtanh.pop %v353
  %356 = vrot.lane.b32.xlu0 %v354, 64
  %v357 = vpop.permute.xlu0 %356
  %v359 = vmul.f32 %v341, %v357
  %v360 = vpack.c.bf16 %v359, %v359
  %362 = vrot.lane.b32.xlu0 %v360, 32
  %v363 = vpop.permute.xlu0 %362
  %s365 = scalar_lea.vmem [#allocation3], 8
  %366 = vst.msk [vmem:[%s365] sm:$0xf] %vm231, %v363
  %s367 = scalar_lea.vmem [#allocation2], 24
  %v368 = vld [vmem:[%s367] sm:$0xff]
  %v369 = vunpack.c.l.b16 %v360
  %v370 = vpack.c.b16 %v369, %v369
  %371 = vrot.lane.b32.xlu0 %v370, 32
  %v372 = vpop.permute.xlu0 %371
  %v374 = vsel %vm171, %v372, 0
  %376 = vmatpush.bf16.msra.mxu0 0
  %377 = vmatpush.bf16.msra.mxu0 0
  %378 = vmatpush.bf16.msra.mxu0 0
  %379 = vmatpush.bf16.msra.mxu0 0
  %380 = vmatpush.bf16.msra.mxu0 0
  %381 = vmatpush.bf16.msra.mxu0 0
  %382 = vmatpush.bf16.msra.mxu0 %v168
  %383 = vmatpush.bf16.msra.mxu0 %v167
  %384 = vmatmul.bf16.gmra.mxu0 %v374
  %v385 = vpop.f32.mrf.mxu0
  %v386 = vadd.f32 0.0, %v385
  %v387 = vpop.f32.mrf.mxu0
  %388 = vdwg.mxu0
  %v389 = vadd.f32 %v368, %v386
  %v390 = vxor.u32 %v389, 2147483648
  %v391 = vmul.f32 %v390, 1.442695
  %v392 = vpow.pop %v391
  %v393 = vadd.f32 %v392, 1.0
  %v394 = vrcp.pop %v393
  %v395 = vmul.f32 %v393, %v394
  %v396 = vsub.f32 1.0, %v395
  %v397 = vmul.f32 %v394, %v396
  %v398 = vadd.f32 %v394, %v397
  %vm399 = vweird.f32 %v393
  %vm400 = vweird.f32 %v394
  %vm401 = vmor %vm399, %vm400
  %v402 = vsel %vm401, %v394, %v398
  %v403 = vand.u32 2147483647, %v393
  %vm404 = vcmp.eq.f32.partialorder %v403, 8.507059e+37
  %v405 = vand.u32 %v393, 2147483648
  %v406 = vor.u32 1.1754944e-38, %v405
  %v407 = vsel %vm404, %v406, %v402
  %v408 = vmul.f32 1.0, %v407
  %v409 = vtanh.pop %v389
  %v410 = vmul.f32 %v408, %v353
  %412 = vrot.lane.b32.xlu0 %v409, 64
  %v413 = vpop.permute.xlu0 %412
  %v415 = vmul.f32 %v408, %v413
  %417 = vrot.lane.b32.xlu0 %v415, 32
  %v418 = vpop.permute.xlu0 %417
  %v420 = vadd.f32 %v410, %v418
  %v421 = vtanh.pop %v420
  %423 = vrot.lane.b32.xlu0 %v421, 64
  %v424 = vpop.permute.xlu0 %423
  %v426 = vmul.f32 %v408, %v424
  %v427 = vpack.c.bf16 %v426, %v426
  %429 = vrot.lane.b32.xlu0 %v427, 32
  %v430 = vpop.permute.xlu0 %429
  %s432 = scalar_lea.vmem [#allocation3], 12
  %433 = vst.msk [vmem:[%s432] sm:$0xf] %vm231, %v430
  %s434 = scalar_lea.vmem [#allocation2], 32
  %v435 = vld [vmem:[%s434] sm:$0xff]
  %v436 = vunpack.c.l.b16 %v427
  %v437 = vpack.c.b16 %v436, %v436
  %438 = vrot.lane.b32.xlu0 %v437, 32
  %v439 = vpop.permute.xlu0 %438
  %v441 = vsel %vm171, %v439, 0
  %443 = vmatpush.bf16.msra.mxu0 0
  %444 = vmatpush.bf16.msra.mxu0 0
  %445 = vmatpush.bf16.msra.mxu0 0
  %446 = vmatpush.bf16.msra.mxu0 0
  %447 = vmatpush.bf16.msra.mxu0 0
  %448 = vmatpush.bf16.msra.mxu0 0
  %449 = vmatpush.bf16.msra.mxu0 %v168
  %450 = vmatpush.bf16.msra.mxu0 %v167
  %451 = vmatmul.bf16.gmra.mxu0 %v441
  %v452 = vpop.f32.mrf.mxu0
  %v453 = vadd.f32 0.0, %v452
  %v454 = vpop.f32.mrf.mxu0
  %455 = vdwg.mxu0
  %v456 = vadd.f32 %v435, %v453
  %v457 = vxor.u32 %v456, 2147483648
  %v458 = vmul.f32 %v457, 1.442695
  %v459 = vpow.pop %v458
  %v460 = vadd.f32 %v459, 1.0
  %v461 = vrcp.pop %v460
  %v462 = vmul.f32 %v460, %v461
  %v463 = vsub.f32 1.0, %v462
  %v464 = vmul.f32 %v461, %v463
  %v465 = vadd.f32 %v461, %v464
  %vm466 = vweird.f32 %v460
  %vm467 = vweird.f32 %v461
  %vm468 = vmor %vm466, %vm467
  %v469 = vsel %vm468, %v461, %v465
  %v470 = vand.u32 2147483647, %v460
  %vm471 = vcmp.eq.f32.partialorder %v470, 8.507059e+37
  %v472 = vand.u32 %v460, 2147483648
  %v473 = vor.u32 1.1754944e-38, %v472
  %v474 = vsel %vm471, %v473, %v469
  %v475 = vmul.f32 1.0, %v474
  %v476 = vtanh.pop %v456
  %v477 = vmul.f32 %v475, %v420
  %479 = vrot.lane.b32.xlu0 %v476, 64
  %v480 = vpop.permute.xlu0 %479
  %v482 = vmul.f32 %v475, %v480
  %484 = vrot.lane.b32.xlu0 %v482, 32
  %v485 = vpop.permute.xlu0 %484
  %v487 = vadd.f32 %v477, %v485
  %v488 = vtanh.pop %v487
  %490 = vrot.lane.b32.xlu0 %v488, 64
  %v491 = vpop.permute.xlu0 %490
  %v493 = vmul.f32 %v475, %v491
  %v494 = vpack.c.bf16 %v493, %v493
  %496 = vrot.lane.b32.xlu0 %v494, 32
  %v497 = vpop.permute.xlu0 %496
  %s499 = scalar_lea.vmem [#allocation3], 16
  %500 = vst.msk [vmem:[%s499] sm:$0xf] %vm231, %v497
  %s501 = scalar_lea.vmem [#allocation2], 40
  %v502 = vld [vmem:[%s501] sm:$0xff]
  %v503 = vunpack.c.l.b16 %v494
  %v504 = vpack.c.b16 %v503, %v503
  %505 = vrot.lane.b32.xlu0 %v504, 32
  %v506 = vpop.permute.xlu0 %505
  %v508 = vsel %vm171, %v506, 0
  %510 = vmatpush.bf16.msra.mxu0 0
  %511 = vmatpush.bf16.msra.mxu0 0
  %512 = vmatpush.bf16.msra.mxu0 0
  %513 = vmatpush.bf16.msra.mxu0 0
  %514 = vmatpush.bf16.msra.mxu0 0
  %515 = vmatpush.bf16.msra.mxu0 0
  %516 = vmatpush.bf16.msra.mxu0 %v168
  %517 = vmatpush.bf16.msra.mxu0 %v167
  %518 = vmatmul.bf16.gmra.mxu0 %v508
  %v519 = vpop.f32.mrf.mxu0
  %v520 = vadd.f32 0.0, %v519
  %v521 = vpop.f32.mrf.mxu0
  %522 = vdwg.mxu0
  %v523 = vadd.f32 %v502, %v520
  %v524 = vxor.u32 %v523, 2147483648
  %v525 = vmul.f32 %v524, 1.442695
  %v526 = vpow.pop %v525
  %v527 = vadd.f32 %v526, 1.0
  %v528 = vrcp.pop %v527
  %v529 = vmul.f32 %v527, %v528
  %v530 = vsub.f32 1.0, %v529
  %v531 = vmul.f32 %v528, %v530
  %v532 = vadd.f32 %v528, %v531
  %vm533 = vweird.f32 %v527
  %vm534 = vweird.f32 %v528
  %vm535 = vmor %vm533, %vm534
  %v536 = vsel %vm535, %v528, %v532
  %v537 = vand.u32 2147483647, %v527
  %vm538 = vcmp.eq.f32.partialorder %v537, 8.507059e+37
  %v539 = vand.u32 %v527, 2147483648
  %v540 = vor.u32 1.1754944e-38, %v539
  %v541 = vsel %vm538, %v540, %v536
  %v542 = vmul.f32 1.0, %v541
  %v543 = vtanh.pop %v523
  %v544 = vmul.f32 %v542, %v487
  %546 = vrot.lane.b32.xlu0 %v543, 64
  %v547 = vpop.permute.xlu0 %546
  %v549 = vmul.f32 %v542, %v547
  %551 = vrot.lane.b32.xlu0 %v549, 32
  %v552 = vpop.permute.xlu0 %551
  %v554 = vadd.f32 %v544, %v552
  %v555 = vtanh.pop %v554
  %557 = vrot.lane.b32.xlu0 %v555, 64
  %v558 = vpop.permute.xlu0 %557
  %v560 = vmul.f32 %v542, %v558
  %v561 = vpack.c.bf16 %v560, %v560
  %563 = vrot.lane.b32.xlu0 %v561, 32
  %v564 = vpop.permute.xlu0 %563
  %s566 = scalar_lea.vmem [#allocation3], 20
  %567 = vst.msk [vmem:[%s566] sm:$0xf] %vm231, %v564
  %s568 = scalar_lea.vmem [#allocation2], 48
  %v569 = vld [vmem:[%s568] sm:$0xff]
  %v570 = vunpack.c.l.b16 %v561
  %v571 = vpack.c.b16 %v570, %v570
  %572 = vrot.lane.b32.xlu0 %v571, 32
  %v573 = vpop.permute.xlu0 %572
  %v575 = vsel %vm171, %v573, 0
  %577 = vmatpush.bf16.msra.mxu0 0
  %578 = vmatpush.bf16.msra.mxu0 0
  %579 = vmatpush.bf16.msra.mxu0 0
  %580 = vmatpush.bf16.msra.mxu0 0
  %581 = vmatpush.bf16.msra.mxu0 0
  %582 = vmatpush.bf16.msra.mxu0 0
  %583 = vmatpush.bf16.msra.mxu0 %v168
  %584 = vmatpush.bf16.msra.mxu0 %v167
  %585 = vmatmul.bf16.gmra.mxu0 %v575
  %v586 = vpop.f32.mrf.mxu0
  %v587 = vadd.f32 0.0, %v586
  %v588 = vpop.f32.mrf.mxu0
  %589 = vdwg.mxu0
  %v590 = vadd.f32 %v569, %v587
  %v591 = vxor.u32 %v590, 2147483648
  %v592 = vmul.f32 %v591, 1.442695
  %v593 = vpow.pop %v592
  %v594 = vadd.f32 %v593, 1.0
  %v595 = vrcp.pop %v594
  %v596 = vmul.f32 %v594, %v595
  %v597 = vsub.f32 1.0, %v596
  %v598 = vmul.f32 %v595, %v597
  %v599 = vadd.f32 %v595, %v598
  %vm600 = vweird.f32 %v594
  %vm601 = vweird.f32 %v595
  %vm602 = vmor %vm600, %vm601
  %v603 = vsel %vm602, %v595, %v599
  %v604 = vand.u32 2147483647, %v594
  %vm605 = vcmp.eq.f32.partialorder %v604, 8.507059e+37
  %v606 = vand.u32 %v594, 2147483648
  %v607 = vor.u32 1.1754944e-38, %v606
  %v608 = vsel %vm605, %v607, %v603
  %v609 = vmul.f32 1.0, %v608
  %v610 = vtanh.pop %v590
  %v611 = vmul.f32 %v609, %v554
  %613 = vrot.lane.b32.xlu0 %v610, 64
  %v614 = vpop.permute.xlu0 %613
  %v616 = vmul.f32 %v609, %v614
  %618 = vrot.lane.b32.xlu0 %v616, 32
  %v619 = vpop.permute.xlu0 %618
  %v621 = vadd.f32 %v611, %v619
  %v622 = vtanh.pop %v621
  %624 = vrot.lane.b32.xlu0 %v622, 64
  %v625 = vpop.permute.xlu0 %624
  %v627 = vmul.f32 %v609, %v625
  %v628 = vpack.c.bf16 %v627, %v627
  %630 = vrot.lane.b32.xlu0 %v628, 32
  %v631 = vpop.permute.xlu0 %630
  %s633 = scalar_lea.vmem [#allocation3], 24
  %634 = vst.msk [vmem:[%s633] sm:$0xf] %vm231, %v631
  %s635 = scalar_lea.vmem [#allocation2], 56
  %v636 = vld [vmem:[%s635] sm:$0xff]
  %v637 = vunpack.c.l.b16 %v628
  %v638 = vpack.c.b16 %v637, %v637
  %639 = vrot.lane.b32.xlu0 %v638, 32
  %v640 = vpop.permute.xlu0 %639
  %v642 = vsel %vm171, %v640, 0
  %644 = vmatpush.bf16.msra.mxu0 0
  %645 = vmatpush.bf16.msra.mxu0 0
  %646 = vmatpush.bf16.msra.mxu0 0
  %647 = vmatpush.bf16.msra.mxu0 0
  %648 = vmatpush.bf16.msra.mxu0 0
  %649 = vmatpush.bf16.msra.mxu0 0
  %650 = vmatpush.bf16.msra.mxu0 %v168
  %651 = vmatpush.bf16.msra.mxu0 %v167
  %652 = vmatmul.bf16.gmra.mxu0 %v642
  %v653 = vpop.f32.mrf.mxu0
  %v654 = vadd.f32 0.0, %v653
  %v655 = vpop.f32.mrf.mxu0
  %656 = vdwg.mxu0
  %v657 = vadd.f32 %v636, %v654
  %v658 = vxor.u32 %v657, 2147483648
  %v659 = vmul.f32 %v658, 1.442695
  %v660 = vpow.pop %v659
  %v661 = vadd.f32 %v660, 1.0
  %v662 = vrcp.pop %v661
  %v663 = vmul.f32 %v661, %v662
  %v664 = vsub.f32 1.0, %v663
  %v665 = vmul.f32 %v662, %v664
  %v666 = vadd.f32 %v662, %v665
  %vm667 = vweird.f32 %v661
  %vm668 = vweird.f32 %v662
  %vm669 = vmor %vm667, %vm668
  %v670 = vsel %vm669, %v662, %v666
  %v671 = vand.u32 2147483647, %v661
  %vm672 = vcmp.eq.f32.partialorder %v671, 8.507059e+37
  %v673 = vand.u32 %v661, 2147483648
  %v674 = vor.u32 1.1754944e-38, %v673
  %v675 = vsel %vm672, %v674, %v670
  %v676 = vmul.f32 1.0, %v675
  %v677 = vtanh.pop %v657
  %v678 = vmul.f32 %v676, %v621
  %680 = vrot.lane.b32.xlu0 %v677, 64
  %v681 = vpop.permute.xlu0 %680
  %v683 = vmul.f32 %v676, %v681
  %685 = vrot.lane.b32.xlu0 %v683, 32
  %v686 = vpop.permute.xlu0 %685
  %v688 = vadd.f32 %v678, %v686
  %v689 = vtanh.pop %v688
  %691 = vrot.lane.b32.xlu0 %v689, 64
  %v692 = vpop.permute.xlu0 %691
  %v694 = vmul.f32 %v676, %v692
  %v695 = vpack.c.bf16 %v694, %v694
  %697 = vrot.lane.b32.xlu0 %v695, 32
  %v698 = vpop.permute.xlu0 %697
  %s700 = scalar_lea.vmem [#allocation3], 28
  %701 = vst.msk [vmem:[%s700] sm:$0xf] %vm231, %v698
  %v702 = vld [vmem:[#allocation3] sm:$0xf]
  %v703 = vld [vmem:[#allocation3 + $0x4] sm:$0xf]
  %v704 = vld [vmem:[#allocation3 + $0x8] sm:$0xf]
  %v705 = vld [vmem:[#allocation3 + $0xc] sm:$0xf]
  %v706 = vld [vmem:[#allocation3 + $0x10] sm:$0xf]
  %v707 = vld [vmem:[#allocation3 + $0x14] sm:$0xf]
  %v708 = vld [vmem:[#allocation3 + $0x18] sm:$0xf]
  %v709 = vld [vmem:[#allocation3 + $0x1c] sm:$0xf]
  %v710 = vld [vmem:[%s7] sm:$0xf]
  %v711 = vld [vmem:[%s7 + $0x4] sm:$0xf]
  %v712 = vld [vmem:[%s7 + $0x8] sm:$0xf]
  %v713 = vld [vmem:[%s7 + $0xc] sm:$0xf]
  %v714 = vld [vmem:[%s8] sm:$0x1]
  %v716 = vperm.slane %v714, 0
  %v726 = vunpack.c.l.b16 %v702
  %v727 = vunpack.c.l.b16 %v703
  %v728 = vunpack.c.l.b16 %v704
  %v729 = vunpack.c.l.b16 %v705
  %v730 = vunpack.c.l.b16 %v706
  %v731 = vunpack.c.l.b16 %v707
  %v732 = vunpack.c.l.b16 %v708
  %v733 = vunpack.c.l.b16 %v709
  %v734 = vpack.c.b16 %v727, %v726
  %v735 = vpack.c.b16 %v729, %v728
  %v736 = vpack.c.b16 %v731, %v730
  %v737 = vpack.c.b16 %v733, %v732
  %v742 = vunpack.c.l.b16 %v710
  %v743 = vunpack.c.l.b16 %v711
  %v744 = vunpack.c.l.b16 %v712
  %v745 = vunpack.c.l.b16 %v713
  %v746 = vpack.c.b16 %v743, %v742
  %v747 = vpack.c.b16 %v745, %v744
  %v751 = vsel %vm171, %v734, 0
  %v754 = vsel %vm171, %v735, 0
  %v757 = vsel %vm171, %v736, 0
  %v760 = vsel %vm171, %v737, 0
  %762 = vmatpush.bf16.msra.mxu0 0
  %763 = vmatpush.bf16.msra.mxu0 0
  %764 = vmatpush.bf16.msra.mxu0 0
  %765 = vmatpush.bf16.msra.mxu0 0
  %766 = vmatpush.bf16.msra.mxu0 0
  %767 = vmatpush.bf16.msra.mxu0 0
  %768 = vmatpush.bf16.msra.mxu0 %v747
  %769 = vmatpush.bf16.msra.mxu0 %v746
  %770 = vmatmul.bf16.gmra.mxu0 %v751
  %v771 = vpop.f32.mrf.mxu0
  %v772 = vadd.f32 %v716, %v771
  %v773 = vpop.f32.mrf.mxu0
  %v774 = vadd.f32 %v716, %v773
  %775 = vmatmul.bf16.gmra.mxu0 %v754
  %v776 = vpop.f32.mrf.mxu0
  %v777 = vadd.f32 %v716, %v776
  %v778 = vpop.f32.mrf.mxu0
  %v779 = vadd.f32 %v716, %v778
  %780 = vmatmul.bf16.gmra.mxu0 %v757
  %v781 = vpop.f32.mrf.mxu0
  %v782 = vadd.f32 %v716, %v781
  %v783 = vpop.f32.mrf.mxu0
  %v784 = vadd.f32 %v716, %v783
  %785 = vmatmul.bf16.gmra.mxu0 %v760
  %v786 = vpop.f32.mrf.mxu0
  %v787 = vadd.f32 %v716, %v786
  %v788 = vpop.f32.mrf.mxu0
  %v789 = vadd.f32 %v716, %v788
  %790 = vdwg.mxu0
  %v791 = vlaneseq
  %v792 = vand.u32 %v791, 127
  %vm793 = vcmp.lt.s32.totalorder %v792, 8
  %vm794 = vcmp.gt.f32.partialorder %v772, 20.0
  %vm795 = vcmp.gt.f32.partialorder %v774, 20.0
  %vm796 = vcmp.gt.f32.partialorder %v777, 20.0
  %vm797 = vcmp.gt.f32.partialorder %v779, 20.0
  %vm798 = vcmp.gt.f32.partialorder %v782, 20.0
  %vm799 = vcmp.gt.f32.partialorder %v784, 20.0
  %vm800 = vcmp.gt.f32.partialorder %v787, 20.0
  %vm801 = vcmp.gt.f32.partialorder %v789, 20.0
  %v802 = vmin.f32 %v772, 20.0
  %v803 = vmin.f32 %v774, 20.0
  %v804 = vmin.f32 %v777, 20.0
  %v805 = vmin.f32 %v779, 20.0
  %v806 = vmin.f32 %v782, 20.0
  %v807 = vmin.f32 %v784, 20.0
  %v808 = vmin.f32 %v787, 20.0
  %v809 = vmin.f32 %v789, 20.0
  %v810 = vmul.f32 %v802, 1.442695
  %v811 = vpow.pop %v810
  %v812 = vmul.f32 %v803, 1.442695
  %v813 = vpow.pop %v812
  %v814 = vmul.f32 %v804, 1.442695
  %v815 = vpow.pop %v814
  %v816 = vmul.f32 %v805, 1.442695
  %v817 = vpow.pop %v816
  %v818 = vmul.f32 %v806, 1.442695
  %v819 = vpow.pop %v818
  %v820 = vmul.f32 %v807, 1.442695
  %v821 = vpow.pop %v820
  %v822 = vmul.f32 %v808, 1.442695
  %v823 = vpow.pop %v822
  %v824 = vmul.f32 %v809, 1.442695
  %v825 = vpow.pop %v824
  %v826 = vadd.f32 %v811, 1.0
  %v827 = vlog2.pop %v826
  %v828 = vmul.f32 %v827, 0.6931472
  %v829 = vmul.f32 -0.5, %v811
  %v830 = vadd.f32 %v829, 1.0
  %v831 = vmul.f32 %v830, %v811
  %v832 = vand.u32 2147483647, %v811
  %vm833 = vcmp.lt.f32.partialorder %v832, 0.0004427343
  %v834 = vsel %vm833, %v831, %v828
  %v835 = vadd.f32 %v813, 1.0
  %v836 = vlog2.pop %v835
  %v837 = vmul.f32 %v836, 0.6931472
  %v838 = vmul.f32 -0.5, %v813
  %v839 = vadd.f32 %v838, 1.0
  %v840 = vmul.f32 %v839, %v813
  %v841 = vand.u32 2147483647, %v813
  %vm842 = vcmp.lt.f32.partialorder %v841, 0.0004427343
  %v843 = vsel %vm842, %v840, %v837
  %v844 = vadd.f32 %v815, 1.0
  %v845 = vlog2.pop %v844
  %v846 = vmul.f32 %v845, 0.6931472
  %v847 = vmul.f32 -0.5, %v815
  %v848 = vadd.f32 %v847, 1.0
  %v849 = vmul.f32 %v848, %v815
  %v850 = vand.u32 2147483647, %v815
  %vm851 = vcmp.lt.f32.partialorder %v850, 0.0004427343
  %v852 = vsel %vm851, %v849, %v846
  %v853 = vadd.f32 %v817, 1.0
  %v854 = vlog2.pop %v853
  %v855 = vmul.f32 %v854, 0.6931472
  %v856 = vmul.f32 -0.5, %v817
  %v857 = vadd.f32 %v856, 1.0
  %v858 = vmul.f32 %v857, %v817
  %v859 = vand.u32 2147483647, %v817
  %vm860 = vcmp.lt.f32.partialorder %v859, 0.0004427343
  %v861 = vsel %vm860, %v858, %v855
  %v862 = vadd.f32 %v819, 1.0
  %v863 = vlog2.pop %v862
  %v864 = vmul.f32 %v863, 0.6931472
  %v865 = vmul.f32 -0.5, %v819
  %v866 = vadd.f32 %v865, 1.0
  %v867 = vmul.f32 %v866, %v819
  %v868 = vand.u32 2147483647, %v819
  %vm869 = vcmp.lt.f32.partialorder %v868, 0.0004427343
  %v870 = vsel %vm869, %v867, %v864
  %v871 = vadd.f32 %v821, 1.0
  %v872 = vlog2.pop %v871
  %v873 = vmul.f32 %v872, 0.6931472
  %v874 = vmul.f32 -0.5, %v821
  %v875 = vadd.f32 %v874, 1.0
  %v876 = vmul.f32 %v875, %v821
  %v877 = vand.u32 2147483647, %v821
  %vm878 = vcmp.lt.f32.partialorder %v877, 0.0004427343
  %v879 = vsel %vm878, %v876, %v873
  %v880 = vadd.f32 %v823, 1.0
  %v881 = vlog2.pop %v880
  %v882 = vmul.f32 %v881, 0.6931472
  %v883 = vmul.f32 -0.5, %v823
  %v884 = vadd.f32 %v883, 1.0
  %v885 = vmul.f32 %v884, %v823
  %v886 = vand.u32 2147483647, %v823
  %vm887 = vcmp.lt.f32.partialorder %v886, 0.0004427343
  %v888 = vsel %vm887, %v885, %v882
  %v889 = vadd.f32 %v825, 1.0
  %v890 = vlog2.pop %v889
  %v891 = vmul.f32 %v890, 0.6931472
  %v892 = vmul.f32 -0.5, %v825
  %v893 = vadd.f32 %v892, 1.0
  %v894 = vmul.f32 %v893, %v825
  %v895 = vand.u32 2147483647, %v825
  %vm896 = vcmp.lt.f32.partialorder %v895, 0.0004427343
  %v897 = vsel %vm896, %v894, %v891
  %v898 = vsel %vm794, %v772, %v834
  %v899 = vsel %vm795, %v774, %v843
  %v900 = vsel %vm796, %v777, %v852
  %v901 = vsel %vm797, %v779, %v861
  %v902 = vsel %vm798, %v782, %v870
  %v903 = vsel %vm799, %v784, %v879
  %v904 = vsel %vm800, %v787, %v888
  %v905 = vsel %vm801, %v789, %v897
  %v906 = vsel %vm793, %v898, %v772
  %v907 = vsel %vm793, %v899, %v774
  %v908 = vsel %vm793, %v900, %v777
  %v909 = vsel %vm793, %v901, %v779
  %v910 = vsel %vm793, %v902, %v782
  %v911 = vsel %vm793, %v903, %v784
  %v912 = vsel %vm793, %v904, %v787
  %v913 = vsel %vm793, %v905, %v789
  %914 = vst [vmem:[%s9] sm:$0xff] %v906
  %915 = vst [vmem:[%s9 + $0x8] sm:$0xff] %v907
  %916 = vst [vmem:[%s9 + $0x10] sm:$0xff] %v908
  %917 = vst [vmem:[%s9 + $0x18] sm:$0xff] %v909
  %918 = vst [vmem:[%s9 + $0x20] sm:$0xff] %v910
  %919 = vst [vmem:[%s9 + $0x28] sm:$0xff] %v911
  %920 = vst [vmem:[%s9 + $0x30] sm:$0xff] %v912
  %921 = vst [vmem:[%s9 + $0x38] sm:$0xff] %v913
  // Predicated region
  $region38: #{decoder_forward.1} parent=0 // pred_check
    _
  $region39: #{decoder_forward.1} parent=0 // pred_check_branch
    %923 = sbr.rel (0) target = $region41
  $region40: #{decoder_forward.1} parent=0 // pred_region
    _
  $region41: #{decoder_forward.1} parent=0 // pred_fallthru
    _
  // Predicated region
  $region42: #{decoder_forward.1} parent=0 // pred_check
    _
  $region43: #{decoder_forward.1} parent=0 // pred_check_branch
    %925 = sbr.rel (0) target = $region45
  $region44: #{decoder_forward.1} parent=0 // pred_region
    _
  $region45: #{decoder_forward.1} parent=0 // pred_fallthru
    _

</llo_original>
